<compile_context>
chip_gen: v5e
topology: v5e:2x2
jax: 0.10.0
libtpu: 0.0.40
codegen_flags: <defaults>
</compile_context>

<pallas_src>
import functools

import numpy as np
import jax
import jax.numpy as jnp
from jax.experimental import pallas as pl
from jax.experimental.pallas import tpu as pltpu

SPLIT = (3, 2248, 1, 30, 2718)          # sil, eng_1, blank, eng_2, chi
VOCAB = sum(SPLIT)                      # 5000
VOCAB_PAD = 5120                        # 40 * 128 -> lane-dense output slab
LID_DIM = 4                             # [_, sil, chi, eng]
LID_PAD = 128                           # lane-dense lid head / lid HBM output width
SEL_K = 16                              # shrunk K for the bf16 adjustment matmul (rows 1..3 nonzero)
B0 = SPLIT[0]
B1 = B0 + SPLIT[1]
B2 = B1 + SPLIT[2]
B3 = B2 + SPLIT[3]


def _round_up(x, m):
    return (x + m - 1) // m * m


def _cdiv(a, b):
    return -(-a // b)


def _chip_generation():
    """Best-effort TPU generation from device_kind; 0 if unknown."""
    try:
        kind = jax.devices()[0].device_kind.lower()
    except Exception:  # pragma: no cover
        return 0
    for g in (7, 6, 5, 4):
        if f"v{g}" in kind or f"tpu{g}" in kind or f"tpu {g}" in kind:
            return g
    return 0


def _select_tiling(M):
    """Per-generation row tile + VMEM cap (review items: v6e/v7x tm=512, v5e tm=256,
    v7x >=2 row tiles + smaller VMEM cap, tiny-M tile rounded to 16)."""
    gen = _chip_generation()
    if gen >= 7:
        tm = 512
        vmem_limit = 36 * 1024 * 1024    # v7x: 64 MiB VMEM/TC -> leave Mosaic scratch headroom
    elif gen == 6:
        tm = 512                         # v6e is HBM-bound: bigger rows halve head-weight traffic
        vmem_limit = 48 * 1024 * 1024
    else:                                # v5e / older / unknown: already ~roofline-balanced at 256
        tm = 256
        vmem_limit = 48 * 1024 * 1024
    # Adaptive for tiny M; round to 16 rows (bf16 packs 16 rows per sublane tile).
    tm = min(tm, _round_up(max(M, 16), 16))
    # v7x: row axis is the only "parallel" grid dim -> guarantee >= 2 row tiles so both
    # TensorCores of the chip get work (when M is big enough for that to matter).
    if gen >= 7 and M >= 32:
        tm = min(tm, _round_up(_cdiv(M, 2), 16))
    return tm, vmem_limit


def _build_sel_matrix():
    """[SEL_K, VOCAB_PAD] 0/1 bf16 matrix: add = lid_bf16 @ sel reproduces the torch
    split/add/cat logit adjustment (blank column and vocab padding get 0).
    Only rows 1 (sil), 2 (chi), 3 (eng) are nonzero; rows 4..SEL_K-1 are zero padding."""
    sel = np.zeros((SEL_K, VOCAB_PAD), np.float32)
    sel[1, 0:B0] = 1.0        # sil   -> cols [0, 3)
    sel[3, B0:B1] = 1.0       # eng   -> cols [3, 2251)
    sel[3, B2:B3] = 1.0       # eng   -> cols [2252, 2282)
    sel[2, B3:VOCAB] = 1.0    # chi   -> cols [2282, 5000)
    return jnp.asarray(sel, dtype=jnp.bfloat16)   # 0/1 exact in bf16


# ----------------------------- fused Pallas kernel ------------------------------

def _fused_kernel(x_ref, xl_ref, wp_ref, bp_ref, wlp_ref, blp_ref,
                  wlh_ref, blh_ref, wh_ref, bh_ref, sel_ref,
                  adj_ref, lid_ref,
                  proj_sc, lid_bf, *, tn):
    # grid = (row_tiles, vocab_tiles); vocab axis is the inner ("arbitrary") loop.
    n = pl.program_id(1)

    # n==0 does the projector / lid projector / lid head work for this row tile.
    # This per-row-tile compute spike is accepted and amortized by tn=1280 (4 inner steps).
    @pl.when(n == 0)
    def _():
        # projector / lid_projector  (bf16 MXU, f32 accumulate)
        proj = jnp.dot(x_ref[...], wp_ref[...],
                       preferred_element_type=jnp.float32) + bp_ref[...]
        lid_proj = jnp.dot(xl_ref[...], wlp_ref[...],
                           preferred_element_type=jnp.float32) + blp_ref[...]
        # lid head (padded to 128 lanes; cols >= 4 are exactly zero)
        lid_logits = jnp.dot(lid_proj.astype(jnp.bfloat16), wlh_ref[...],
                             preferred_element_type=jnp.float32) + blh_ref[...]
        proj_sc[...] = proj.astype(proj_sc.dtype)      # kept in VMEM for all vocab tiles
        lid_bf[...] = lid_logits[:, :SEL_K].astype(lid_bf.dtype)  # bf16 copy for adjustment
        lid_ref[...] = lid_logits.astype(lid_ref.dtype)           # f32 HBM output

    # main head for this vocab tile (bf16 x bf16, f32 accumulate)
    logits = jnp.dot(proj_sc[...], wh_ref[...],
                     preferred_element_type=jnp.float32) + bh_ref[...]

    # fused logit adjustment: bf16 x bf16 K=16 matmul against the VMEM-resident selection
    # matrix, sliced to this vocab window in-kernel (sel is grid-invariant -> DMA'd once).
    col0 = pl.multiple_of(n * tn, tn)
    sel_win = sel_ref[:, pl.ds(col0, tn)]
    adj = logits + jnp.dot(lid_bf[...], sel_win, preferred_element_type=jnp.float32)
    adj_ref[...] = adj.astype(adj_ref.dtype)


def prepare_params(params):
    """Hoisted (once-per-model) weight prep: padding, bf16 casts, selection matrix."""
    bf = jnp.bfloat16
    F, P = params["proj_w"].shape
    return dict(
        F=F, P=P,
        wp=params["proj_w"].astype(bf),
        wlp=params["lid_proj_w"].astype(bf),
        bp=params["proj_b"].reshape(1, P).astype(jnp.float32),
        blp=params["lid_proj_b"].reshape(1, P).astype(jnp.float32),
        wlh=jnp.zeros((P, LID_PAD), bf).at[:, :LID_DIM].set(params["lid_head_w"].astype(bf)),
        blh=jnp.zeros((1, LID_PAD), jnp.float32).at[0, :LID_DIM].set(params["lid_head_b"]),
        wh=jnp.zeros((P, VOCAB_PAD), bf).at[:, :VOCAB].set(params["head_w"].astype(bf)),
        bh=jnp.zeros((1, VOCAB_PAD), jnp.float32).at[0, :VOCAB].set(params["head_b"]),
        sel=_build_sel_matrix(),
    )


def fused_forward_2d(x, xl, prepped, *, tn=1280):
    """x, xl: [M, F] float; returns adj_logits [M, VOCAB] f32, lid_logits [M, 4] f32."""
    M, F = x.shape
    P = prepped["P"]
    bf = jnp.bfloat16

    tm, vmem_limit = _select_tiling(M)
    M_pad = _round_up(M, tm)
    assert VOCAB_PAD % tn == 0

    # Only activations are padded per call (weights are prepped once in prepare_params).
    x_p = jnp.zeros((M_pad, F), bf).at[:M].set(x.astype(bf))
    xl_p = jnp.zeros((M_pad, F), bf).at[:M].set(xl.astype(bf))

    grid = (M_pad // tm, VOCAB_PAD // tn)
    kernel = functools.partial(_fused_kernel, tn=tn)

    adj_pad, lid_pad = pl.pallas_call(
        kernel,
        out_shape=(jax.ShapeDtypeStruct((M_pad, VOCAB_PAD), jnp.float32),
                   jax.ShapeDtypeStruct((M_pad, LID_PAD), jnp.float32)),
        grid_spec=pltpu.PrefetchScalarGridSpec(
            num_scalar_prefetch=0,
            grid=grid,
            in_specs=[
                pl.BlockSpec((tm, F), lambda i, n: (i, 0)),            # feature rows
                pl.BlockSpec((tm, F), lambda i, n: (i, 0)),            # lid feature rows
                pl.BlockSpec((F, P), lambda i, n: (0, 0)),             # proj_w (grid-invariant)
                pl.BlockSpec((1, P), lambda i, n: (0, 0)),             # proj_b
                pl.BlockSpec((F, P), lambda i, n: (0, 0)),             # lid_proj_w
                pl.BlockSpec((1, P), lambda i, n: (0, 0)),             # lid_proj_b
                pl.BlockSpec((P, LID_PAD), lambda i, n: (0, 0)),       # lid_head_w (padded)
                pl.BlockSpec((1, LID_PAD), lambda i, n: (0, 0)),       # lid_head_b (padded)
                pl.BlockSpec((P, tn), lambda i, n: (0, n)),            # head_w, N-tiled (streamed)
                pl.BlockSpec((1, tn), lambda i, n: (0, n)),            # head_b, N-tiled
                pl.BlockSpec((SEL_K, VOCAB_PAD), lambda i, n: (0, 0)),  # sel: full-res, DMA'd once
            ],
            out_specs=[
                pl.BlockSpec((tm, tn), lambda i, n: (i, n)),           # adj logits (f32)
                pl.BlockSpec((tm, LID_PAD), lambda i, n: (i, 0)),      # lid logits (padded, f32)
            ],
            scratch_shapes=[
                pltpu.VMEM((tm, P), bf),        # projected rows, reused across vocab tiles
                pltpu.VMEM((tm, SEL_K), bf),    # bf16 lid logits for the adjustment matmul
            ],
        ),
        compiler_params=pltpu.CompilerParams(
            dimension_semantics=("parallel", "arbitrary"),
            vmem_limit_bytes=vmem_limit,
        ),
    )(x_p, xl_p, prepped["wp"], prepped["bp"], prepped["wlp"], prepped["blp"],
      prepped["wlh"], prepped["blh"], prepped["wh"], prepped["bh"], prepped["sel"])

    return adj_pad[:M, :VOCAB], lid_pad[:M, :LID_DIM]


# ------------------------------- glue (JAX) --------------------------------

def _pad_batch(seqs, pad_value=0.0):
    max_len = max(s.shape[0] for s in seqs)
    out = []
    for s in seqs:
        pad = [(0, max_len - s.shape[0])] + [(0, 0)] * (s.ndim - 1)
        out.append(jnp.pad(s, pad, constant_values=pad_value))
    return jnp.stack(out, axis=0)


def init_params(key, feature_dim, proj_dim):
    ks = jax.random.split(key, 8)
    s = 0.05
    return dict(
        proj_w=s * jax.random.normal(ks[0], (feature_dim, proj_dim), jnp.float32),
        proj_b=s * jax.random.normal(ks[1], (proj_dim,), jnp.float32),
        lid_proj_w=s * jax.random.normal(ks[2], (feature_dim, proj_dim), jnp.float32),
        lid_proj_b=s * jax.random.normal(ks[3], (proj_dim,), jnp.float32),
        head_w=s * jax.random.normal(ks[4], (proj_dim, VOCAB), jnp.float32),
        head_b=s * jax.random.normal(ks[5], (VOCAB,), jnp.float32),
        lid_head_w=s * jax.random.normal(ks[6], (proj_dim, LID_DIM), jnp.float32),
        lid_head_b=s * jax.random.normal(ks[7], (LID_DIM,), jnp.float32),
    )


def iven_downstream_forward(features_list, lid_features_list, labels_list, prepped):
    features_len = jnp.array([f.shape[0] for f in features_list], dtype=jnp.int32)
    labels_len = jnp.array([l.shape[0] for l in labels_list], dtype=jnp.int32)

    features = _pad_batch(features_list)            # [B, T, F]
    lid_features = _pad_batch(lid_features_list)    # [B, T, F]
    labels = _pad_batch(labels_list, pad_value=0)   # [B, L]

    B, T, F = features.shape
    M = B * T

    adj2d, lid2d = fused_forward_2d(
        features.reshape(M, F), lid_features.reshape(M, F), prepped)

    adj_logits = adj2d.reshape(B, T, VOCAB)
    lid_logits = lid2d.reshape(B, T, LID_DIM)
    return adj_logits, lid_logits, labels, features_len, labels_len


def reference_forward(features_list, lid_features_list, params):
    """Pure-JAX reference mirroring the torch forward (same stand-in heads and the same
    bf16-operand / f32-accumulation numerics as the kernel; the adjustment add is done in
    f32 like torch — the kernel's bf16-rounded lid adds stay well within tolerance)."""
    bf = jnp.bfloat16
    x = _pad_batch(features_list).astype(bf)
    xl = _pad_batch(lid_features_list).astype(bf)
    wp = params["proj_w"].astype(bf)
    wlp = params["lid_proj_w"].astype(bf)
    wh = params["head_w"].astype(bf)
    wlh = params["lid_head_w"].astype(bf)

    proj = (jnp.einsum("btf,fp->btp", x, wp, preferred_element_type=jnp.float32)
            + params["proj_b"]).astype(bf)
    lid_proj = (jnp.einsum("btf,fp->btp", xl, wlp, preferred_element_type=jnp.float32)
                + params["lid_proj_b"]).astype(bf)
    lid_logits = jnp.einsum("btp,pn->btn", lid_proj, wlh,
                            preferred_element_type=jnp.float32) + params["lid_head_b"]
    logits = jnp.einsum("btp,pn->btn", proj, wh,
                        preferred_element_type=jnp.float32) + params["head_b"]

    sil_l = logits[..., :B0]
    eng1 = logits[..., B0:B1]
    blank = logits[..., B1:B2]
    eng2 = logits[..., B2:B3]
    chi_l = logits[..., B3:]
    lid_sil = lid_logits[..., 1:2]
    lid_chi = lid_logits[..., 2:3]
    lid_eng = lid_logits[..., 3:4]
    adj = jnp.concatenate(
        [sil_l + lid_sil, eng1 + lid_eng, blank, eng2 + lid_eng, chi_l + lid_chi],
        axis=-1,
    )
    return adj, lid_logits


if __name__ == "__main__":
    key = jax.random.PRNGKey(0)
    feature_dim, proj_dim = 32, 32
    B, T = 2, 8

    k_feat, k_lid, k_lab, k_par = jax.random.split(key, 4)
    seq_lens = [8, 6]
    lab_lens = [5, 4]

    features_list = [
        jax.random.normal(jax.random.fold_in(k_feat, i), (L, feature_dim), jnp.float32)
        for i, L in enumerate(seq_lens)
    ]
    lid_features_list = [
        jax.random.normal(jax.random.fold_in(k_lid, i), (L, feature_dim), jnp.float32)
        for i, L in enumerate(seq_lens)
    ]
    labels_list = [
        jax.random.randint(jax.random.fold_in(k_lab, i), (L,), 0, VOCAB, jnp.int32)
        for i, L in enumerate(lab_lens)
    ]

    params = init_params(k_par, feature_dim, proj_dim)
    prepped = jax.tree_util.tree_map(
        lambda x: x, prepare_params(params))   # hoisted once-per-model weight prep

    adj_logits, lid_logits, labels, features_len, labels_len = jax.block_until_ready(
        iven_downstream_forward(features_list, lid_features_list, labels_list, prepped)
    )

    # correctness check against pure-JAX reference (same numerics up to bf16 lid rounding)
    ref_adj, ref_lid = reference_forward(features_list, lid_features_list, params)
    assert adj_logits.shape == (B, T, VOCAB)
    assert lid_logits.shape == (B, T, LID_DIM)
    assert bool(jnp.allclose(adj_logits, ref_adj, atol=1e-2, rtol=1e-2))
    assert bool(jnp.allclose(lid_logits, ref_lid, atol=1e-2, rtol=1e-2))
    assert labels.shape == (2, max(lab_lens))
    assert features_len.tolist() == seq_lens and labels_len.tolist() == lab_lens

    print("KERNEL_OK")
</pallas_src>

<mosaic_0001>
module attributes {stable_mosaic.version = 11 : i64} {
  func.func @_fused_kernel(%arg0: i32, %arg1: i32, %arg2: memref<16x32xbf16, #tpu.memory_space<vmem>>, %arg3: memref<16x32xbf16, #tpu.memory_space<vmem>>, %arg4: memref<32x32xbf16, #tpu.memory_space<vmem>>, %arg5: memref<1x32xf32, #tpu.memory_space<vmem>>, %arg6: memref<32x32xbf16, #tpu.memory_space<vmem>>, %arg7: memref<1x32xf32, #tpu.memory_space<vmem>>, %arg8: memref<32x128xbf16, #tpu.memory_space<vmem>>, %arg9: memref<1x128xf32, #tpu.memory_space<vmem>>, %arg10: memref<32x1280xbf16, #tpu.memory_space<vmem>>, %arg11: memref<1x1280xf32, #tpu.memory_space<vmem>>, %arg12: memref<16x5120xbf16, #tpu.memory_space<vmem>>, %arg13: memref<16x1280xf32, #tpu.memory_space<vmem>>, %arg14: memref<16x128xf32, #tpu.memory_space<vmem>>, %arg15: memref<16x32xbf16, #tpu.memory_space<vmem>>, %arg16: memref<16x16xbf16, #tpu.memory_space<vmem>>) attributes {dimension_semantics = [#tpu.dimension_semantics<parallel>, #tpu.dimension_semantics<arbitrary>], iteration_bounds = array<i64: 1, 4>, scalar_prefetch = 0 : i64, scratch_operands = 2 : i64, tpu.core_type = #tpu.core_type<tc>, window_params = [{transform_indices = @transform_0, window_bounds = array<i64: 16, 32>}, {transform_indices = @transform_1, window_bounds = array<i64: 16, 32>}, {pipeline_mode = #tpu.pipeline_mode<synchronous>, transform_indices = @transform_2, window_bounds = array<i64: 32, 32>}, {pipeline_mode = #tpu.pipeline_mode<synchronous>, transform_indices = @transform_3, window_bounds = array<i64: 1, 32>}, {pipeline_mode = #tpu.pipeline_mode<synchronous>, transform_indices = @transform_4, window_bounds = array<i64: 32, 32>}, {pipeline_mode = #tpu.pipeline_mode<synchronous>, transform_indices = @transform_5, window_bounds = array<i64: 1, 32>}, {pipeline_mode = #tpu.pipeline_mode<synchronous>, transform_indices = @transform_6, window_bounds = array<i64: 32, 128>}, {pipeline_mode = #tpu.pipeline_mode<synchronous>, transform_indices = @transform_7, window_bounds = array<i64: 1, 128>}, {transform_indices = @transform_8, window_bounds = array<i64: 32, 1280>}, {transform_indices = @transform_9, window_bounds = array<i64: 1, 1280>}, {pipeline_mode = #tpu.pipeline_mode<synchronous>, transform_indices = @transform_10, window_bounds = array<i64: 16, 5120>}, {transform_indices = @transform_11, window_bounds = array<i64: 16, 1280>}, {transform_indices = @transform_12, window_bounds = array<i64: 16, 128>}]} {
    %c0_i32 = arith.constant 0 : i32
    %0 = arith.cmpi eq, %arg1, %c0_i32 : i32
    %1 = arith.extui %0 : i1 to i32
    %c0_i32_0 = arith.constant 0 : i32
    %2 = arith.cmpi ne, %1, %c0_i32_0 : i32
    scf.if %2 {
      %c0_12 = arith.constant 0 : index
      %c0_13 = arith.constant 0 : index
      %17 = vector.load %arg2[%c0_12, %c0_13] : memref<16x32xbf16, #tpu.memory_space<vmem>>, vector<16x32xbf16>
      %c0_14 = arith.constant 0 : index
      %c0_15 = arith.constant 0 : index
      %18 = vector.load %arg4[%c0_14, %c0_15] : memref<32x32xbf16, #tpu.memory_space<vmem>>, vector<32x32xbf16>
      %cst_16 = arith.constant dense<0.000000e+00> : vector<16x32xf32>
      %19 = tpu.matmul %17, %18, %cst_16 {dimension_numbers = #tpu.dot_dimension_numbers<[1], [0], [0], [1], [0, 0, 1, 1], [], []>} : vector<16x32xbf16>, vector<32x32xbf16>, vector<16x32xf32> -> vector<16x32xf32>
      %c0_17 = arith.constant 0 : index
      %c0_18 = arith.constant 0 : index
      %20 = vector.load %arg5[%c0_17, %c0_18] : memref<1x32xf32, #tpu.memory_space<vmem>>, vector<1x32xf32>
      %21 = vector.broadcast %20 : vector<1x32xf32> to vector<16x32xf32>
      %22 = arith.addf %19, %21 : vector<16x32xf32>
      %c0_19 = arith.constant 0 : index
      %c0_20 = arith.constant 0 : index
      %23 = vector.load %arg3[%c0_19, %c0_20] : memref<16x32xbf16, #tpu.memory_space<vmem>>, vector<16x32xbf16>
      %c0_21 = arith.constant 0 : index
      %c0_22 = arith.constant 0 : index
      %24 = vector.load %arg6[%c0_21, %c0_22] : memref<32x32xbf16, #tpu.memory_space<vmem>>, vector<32x32xbf16>
      %cst_23 = arith.constant dense<0.000000e+00> : vector<16x32xf32>
      %25 = tpu.matmul %23, %24, %cst_23 {dimension_numbers = #tpu.dot_dimension_numbers<[1], [0], [0], [1], [0, 0, 1, 1], [], []>} : vector<16x32xbf16>, vector<32x32xbf16>, vector<16x32xf32> -> vector<16x32xf32>
      %c0_24 = arith.constant 0 : index
      %c0_25 = arith.constant 0 : index
      %26 = vector.load %arg7[%c0_24, %c0_25] : memref<1x32xf32, #tpu.memory_space<vmem>>, vector<1x32xf32>
      %27 = vector.broadcast %26 : vector<1x32xf32> to vector<16x32xf32>
      %28 = arith.addf %25, %27 : vector<16x32xf32>
      %29 = arith.truncf %28 : vector<16x32xf32> to vector<16x32xbf16>
      %c0_26 = arith.constant 0 : index
      %c0_27 = arith.constant 0 : index
      %30 = vector.load %arg8[%c0_26, %c0_27] : memref<32x128xbf16, #tpu.memory_space<vmem>>, vector<32x128xbf16>
      %cst_28 = arith.constant dense<0.000000e+00> : vector<16x128xf32>
      %31 = tpu.matmul %29, %30, %cst_28 {dimension_numbers = #tpu.dot_dimension_numbers<[1], [0], [0], [1], [0, 0, 1, 1], [], []>} : vector<16x32xbf16>, vector<32x128xbf16>, vector<16x128xf32> -> vector<16x128xf32>
      %c0_29 = arith.constant 0 : index
      %c0_30 = arith.constant 0 : index
      %32 = vector.load %arg9[%c0_29, %c0_30] : memref<1x128xf32, #tpu.memory_space<vmem>>, vector<1x128xf32>
      %33 = vector.broadcast %32 : vector<1x128xf32> to vector<16x128xf32>
      %34 = arith.addf %31, %33 : vector<16x128xf32>
      %35 = arith.truncf %22 : vector<16x32xf32> to vector<16x32xbf16>
      %c0_31 = arith.constant 0 : index
      %c0_32 = arith.constant 0 : index
      %36 = vector.load %arg15[%c0_31, %c0_32] : memref<16x32xbf16, #tpu.memory_space<vmem>>, vector<16x32xbf16>
      tpu.vector_store %arg15[%c0_31, %c0_32], %35 {strides = array<i32>} : memref<16x32xbf16, #tpu.memory_space<vmem>>, vector<16x32xbf16>,
      %37 = vector.extract_strided_slice %34 {offsets = [0, 0], sizes = [16, 16], strides = [1, 1]} : vector<16x128xf32> to vector<16x16xf32>
      %38 = arith.truncf %37 : vector<16x16xf32> to vector<16x16xbf16>
      %c0_33 = arith.constant 0 : index
      %c0_34 = arith.constant 0 : index
      %39 = vector.load %arg16[%c0_33, %c0_34] : memref<16x16xbf16, #tpu.memory_space<vmem>>, vector<16x16xbf16>
      tpu.vector_store %arg16[%c0_33, %c0_34], %38 {strides = array<i32>} : memref<16x16xbf16, #tpu.memory_space<vmem>>, vector<16x16xbf16>,
      %c0_35 = arith.constant 0 : index
      %c0_36 = arith.constant 0 : index
      %40 = vector.load %arg14[%c0_35, %c0_36] : memref<16x128xf32, #tpu.memory_space<vmem>>, vector<16x128xf32>
      tpu.vector_store %arg14[%c0_35, %c0_36], %34 {strides = array<i32>} : memref<16x128xf32, #tpu.memory_space<vmem>>, vector<16x128xf32>,
    } else {
    }
    %c0 = arith.constant 0 : index
    %c0_1 = arith.constant 0 : index
    %3 = vector.load %arg15[%c0, %c0_1] : memref<16x32xbf16, #tpu.memory_space<vmem>>, vector<16x32xbf16>
    %c0_2 = arith.constant 0 : index
    %c0_3 = arith.constant 0 : index
    %4 = vector.load %arg10[%c0_2, %c0_3] : memref<32x1280xbf16, #tpu.memory_space<vmem>>, vector<32x1280xbf16>
    %cst = arith.constant dense<0.000000e+00> : vector<16x1280xf32>
    %5 = tpu.matmul %3, %4, %cst {dimension_numbers = #tpu.dot_dimension_numbers<[1], [0], [0], [1], [0, 0, 1, 1], [], []>} : vector<16x32xbf16>, vector<32x1280xbf16>, vector<16x1280xf32> -> vector<16x1280xf32>
    %c0_4 = arith.constant 0 : index
    %c0_5 = arith.constant 0 : index
    %6 = vector.load %arg11[%c0_4, %c0_5] : memref<1x1280xf32, #tpu.memory_space<vmem>>, vector<1x1280xf32>
    %7 = vector.broadcast %6 : vector<1x1280xf32> to vector<16x1280xf32>
    %8 = arith.addf %5, %7 : vector<16x1280xf32>
    %c1280_i32 = arith.constant 1280 : i32
    %9 = arith.muli %arg1, %c1280_i32 : i32
    %10 = tpu.assume_multiple %9, 1280 : i32
    %c0_6 = arith.constant 0 : index
    %11 = arith.index_cast %10 : i32 to index
    %12 = vector.load %arg12[%c0_6, %11] : memref<16x5120xbf16, #tpu.memory_space<vmem>>, vector<16x1280xbf16>
    %c0_7 = arith.constant 0 : index
    %c0_8 = arith.constant 0 : index
    %13 = vector.load %arg16[%c0_7, %c0_8] : memref<16x16xbf16, #tpu.memory_space<vmem>>, vector<16x16xbf16>
    %cst_9 = arith.constant dense<0.000000e+00> : vector<16x1280xf32>
    %14 = tpu.matmul %13, %12, %cst_9 {dimension_numbers = #tpu.dot_dimension_numbers<[1], [0], [0], [1], [0, 0, 1, 1], [], []>} : vector<16x16xbf16>, vector<16x1280xbf16>, vector<16x1280xf32> -> vector<16x1280xf32>
    %15 = arith.addf %8, %14 : vector<16x1280xf32>
    %c0_10 = arith.constant 0 : index
    %c0_11 = arith.constant 0 : index
    %16 = vector.load %arg13[%c0_10, %c0_11] : memref<16x1280xf32, #tpu.memory_space<vmem>>, vector<16x1280xf32>
    tpu.vector_store %arg13[%c0_10, %c0_11], %15 {strides = array<i32>} : memref<16x1280xf32, #tpu.memory_space<vmem>>, vector<16x1280xf32>,
    return
  }
  func.func @transform_0(%arg0: i32, %arg1: i32) -> (i32, i32) {
    %c0_i32 = arith.constant 0 : i32
    %c0_i32_0 = arith.constant 0 : i32
    return %arg0, %c0_i32 : i32, i32
  }
  func.func @transform_1(%arg0: i32, %arg1: i32) -> (i32, i32) {
    %c0_i32 = arith.constant 0 : i32
    %c0_i32_0 = arith.constant 0 : i32
    return %arg0, %c0_i32 : i32, i32
  }
  func.func @transform_2(%arg0: i32, %arg1: i32) -> (i32, i32) {
    %c0_i32 = arith.constant 0 : i32
    %c0_i32_0 = arith.constant 0 : i32
    %c0_i32_1 = arith.constant 0 : i32
    return %c0_i32, %c0_i32_0 : i32, i32
  }
  func.func @transform_3(%arg0: i32, %arg1: i32) -> (i32, i32) {
    %c0_i32 = arith.constant 0 : i32
    %c0_i32_0 = arith.constant 0 : i32
    %c0_i32_1 = arith.constant 0 : i32
    return %c0_i32, %c0_i32_0 : i32, i32
  }
  func.func @transform_4(%arg0: i32, %arg1: i32) -> (i32, i32) {
    %c0_i32 = arith.constant 0 : i32
    %c0_i32_0 = arith.constant 0 : i32
    %c0_i32_1 = arith.constant 0 : i32
    return %c0_i32, %c0_i32_0 : i32, i32
  }
  func.func @transform_5(%arg0: i32, %arg1: i32) -> (i32, i32) {
    %c0_i32 = arith.constant 0 : i32
    %c0_i32_0 = arith.constant 0 : i32
    %c0_i32_1 = arith.constant 0 : i32
    return %c0_i32, %c0_i32_0 : i32, i32
  }
  func.func @transform_6(%arg0: i32, %arg1: i32) -> (i32, i32) {
    %c0_i32 = arith.constant 0 : i32
    %c0_i32_0 = arith.constant 0 : i32
    %c0_i32_1 = arith.constant 0 : i32
    return %c0_i32, %c0_i32_0 : i32, i32
  }
  func.func @transform_7(%arg0: i32, %arg1: i32) -> (i32, i32) {
    %c0_i32 = arith.constant 0 : i32
    %c0_i32_0 = arith.constant 0 : i32
    %c0_i32_1 = arith.constant 0 : i32
    return %c0_i32, %c0_i32_0 : i32, i32
  }
  func.func @transform_8(%arg0: i32, %arg1: i32) -> (i32, i32) {
    %c0_i32 = arith.constant 0 : i32
    %c0_i32_0 = arith.constant 0 : i32
    return %c0_i32, %arg1 : i32, i32
  }
  func.func @transform_9(%arg0: i32, %arg1: i32) -> (i32, i32) {
    %c0_i32 = arith.constant 0 : i32
    %c0_i32_0 = arith.constant 0 : i32
    return %c0_i32, %arg1 : i32, i32
  }
  func.func @transform_10(%arg0: i32, %arg1: i32) -> (i32, i32) {
    %c0_i32 = arith.constant 0 : i32
    %c0_i32_0 = arith.constant 0 : i32
    %c0_i32_1 = arith.constant 0 : i32
    return %c0_i32, %c0_i32_0 : i32, i32
  }
  func.func @transform_11(%arg0: i32, %arg1: i32) -> (i32, i32) {
    %c0_i32 = arith.constant 0 : i32
    return %arg0, %arg1 : i32, i32
  }
  func.func @transform_12(%arg0: i32, %arg1: i32) -> (i32, i32) {
    %c0_i32 = arith.constant 0 : i32
    %c0_i32_0 = arith.constant 0 : i32
    return %arg0, %c0_i32 : i32, i32
  }
}

</mosaic_0001>

<llo_original>
// kernel: tpu_custom_call.1
$region0: #{tpu_custom_call.1}
  #allocation0 [shape = 'u32[]', space=smem, size = 0x4, offset = 0x4, fixed_abs, tag = 'smem constant byte address 0x4 - core index']
  #allocation1 [shape = 'u32[72,128]{1,0:T(1,128)}', space=vmem, size = 0x9000, scoped, tag = 'internal scratch']
  #allocation2 [shape = 'bf16[16,32]{1,0:T(8,128)(2,1)}', space=vmem, size = 0x1000, scoped, tag = 'scratch operand']
  #allocation3 [shape = 'bf16[16,16]{1,0:T(8,128)(2,1)}', space=vmem, size = 0x1000, scoped, tag = 'scratch operand']
  %s0 = inlined_call_operand.hbm [shape: bf16[16,32], index: 0, kind: input, shape index: {}]
  %s1 = inlined_call_operand.hbm [shape: bf16[16,32], index: 1, kind: input, shape index: {}]
  %s2 = inlined_call_operand.hbm [shape: bf16[32,32], index: 2, kind: input, shape index: {}]
  %s3 = inlined_call_operand.vmem [shape: f32[1,32], index: 3, kind: input, shape index: {}]
  %s4 = inlined_call_operand.hbm [shape: bf16[32,32], index: 4, kind: input, shape index: {}]
  %s5 = inlined_call_operand.vmem [shape: f32[1,32], index: 5, kind: input, shape index: {}]
  %s6 = inlined_call_operand.hbm [shape: bf16[32,128], index: 6, kind: input, shape index: {}]
  %s7 = inlined_call_operand.vmem [shape: f32[1,128], index: 7, kind: input, shape index: {}]
  %s8 = inlined_call_operand.hbm [shape: bf16[32,5120], index: 8, kind: input, shape index: {}]
  %s9 = inlined_call_operand.hbm [shape: f32[1,5120], index: 9, kind: input, shape index: {}]
  %s10 = inlined_call_operand.hbm [shape: bf16[16,5120], index: 10, kind: input, shape index: {}]
  %s11 = inlined_call_operand.hbm [shape: f32[16,5120], index: 11, kind: output, shape index: {0}]
  %s12 = inlined_call_operand.hbm [shape: f32[16,128], index: 12, kind: output, shape index: {1}]
  %13 = xla_tuple %s11, %s12
  %s14 = sld [smem:[#allocation0]]
  $region121: #{tpu_custom_call.1} parent=0
    _
  %s16 = ssub.s32 1, %s14
  %s17 = scalar_select 0, %s16, %s14
  $region1: #{tpu_custom_call.1} parent=0
    #allocation4 [shape = 'u8[4096]{0}', space=vmem, size = 0x1000, scoped, tag = 'input window, operand 0, single buffered']
    #allocation5 [shape = 's32[2]{0}', space=sflag, size = 0x8, scoped, tag = 'scoped memory for tpu_custom_call.1']
    #allocation6 [shape = 's32[2]{0}', space=sflag, size = 0x8, scoped, tag = 'scoped memory for tpu_custom_call.1']
    #allocation7 [shape = 'u8[4096]{0}', space=vmem, size = 0x1000, scoped, tag = 'input window, operand 1, single buffered']
    #allocation8 [shape = 's32[1]{0}', space=sflag, size = 0x4, scoped, tag = 'scoped memory for tpu_custom_call.1']
    #allocation9 [shape = 'u8[8192]{0}', space=vmem, size = 0x2000, scoped, tag = 'input window, operand 2, single buffered']
    #allocation10 [shape = 'u8[8192]{0}', space=vmem, size = 0x2000, scoped, tag = 'input window, operand 4, single buffered']
    #allocation11 [shape = 's32[1]{0}', space=sflag, size = 0x4, scoped, tag = 'scoped memory for tpu_custom_call.1']
    #allocation12 [shape = 'u8[8192]{0}', space=vmem, size = 0x2000, scoped, tag = 'input window, operand 6, single buffered']
    #allocation13 [shape = 'u8[163840]{0}', space=vmem, size = 0x28000, scoped, tag = 'input window, operand 8']
    #allocation14 [shape = 's32[2]{0}', space=sflag, size = 0x8, scoped, tag = 'scoped memory for tpu_custom_call.1']
    #allocation15 [shape = 'u8[10240]{0}', space=vmem, size = 0x2800, scoped, tag = 'input window, operand 9']
    #allocation16 [shape = 'u8[163840]{0}', space=vmem, size = 0x28000, scoped, tag = 'input window, operand 10, single buffered']
    #allocation17 [shape = 's32[1]{0}', space=sflag, size = 0x4, scoped, tag = 'scoped memory for tpu_custom_call.1']
    #allocation18 [shape = 'u8[163840]{0}', space=vmem, size = 0x28000, scoped, tag = 'output window, operand 0']
    #allocation19 [shape = 'u8[8192]{0}', space=vmem, size = 0x2000, scoped, tag = 'output window, operand 1, single buffered']
    #allocation20 [shape = 's32[1]{0}', space=sflag, size = 0x4, scoped, tag = 'scoped memory for tpu_custom_call.1']
    %18 = vsyncpa [#allocation5], 0
    %19 = vsyncpa [#allocation8], 0
    %20 = vsyncpa [#allocation11], 0
    %21 = vsyncpa [#allocation14], 0
    %s22 = scalar_lea.sflag [#allocation14], 1
    %23 = vsyncpa %s22, 0
    %24 = vsyncpa [#allocation17], 0
    %25 = vsyncpa [#allocation6], 0
    %s26 = scalar_lea.sflag [#allocation6], 1
    %27 = vsyncpa %s26, 0
    %28 = vsyncpa [#allocation20], 0
    loop: start=0, step=1, limit=6
    $region2: #{tpu_custom_call.1} parent=1 // loop_pre_header
      _
    $region3: #{tpu_custom_call.1} parent=1 // loop_header
      %s30 = sphi 0, %s34
      %p31 = scmp.ge.s32.totalorder %s30, 6
      %s37 = sphi 0, %s49
      %s38 = sphi 0, %s45
      %s39 = sphi 0, %s37
      %s40 = sphi 0, %s38
      %s41 = sphi 0, %s39
      %s42 = sphi 0, %s40
      %s52 = sphi 0, %s54
      %s55 = sphi 0, %s52
      %s56 = sphi 0, %s55
      %s72 = sphi 0, %s56
      %s78 = sphi 0, %s80
      %s81 = sphi 0, %s78
      %s82 = sphi 0, %s81
      %s98 = sphi 0, %s82
      %s102 = sphi 0, %s102
      %s104 = sphi 0, %s102
      %s105 = sphi 0, %s104
      %s119 = sphi 0, %s105
      %s123 = sphi 0, %s123
      %s125 = sphi 0, %s123
      %s126 = sphi 0, %s125
      %s140 = sphi 0, %s126
      %s144 = sphi 0, %s144
      %s146 = sphi 0, %s144
      %s147 = sphi 0, %s146
      %s161 = sphi 0, %s147
      %s165 = sphi 0, %s165
      %s167 = sphi 0, %s165
      %s168 = sphi 0, %s167
      %s182 = sphi 0, %s168
      %s186 = sphi 0, %s186
      %s188 = sphi 0, %s186
      %s189 = sphi 0, %s188
      %s203 = sphi 0, %s189
      %s207 = sphi 0, %s207
      %s209 = sphi 0, %s207
      %s210 = sphi 0, %s209
      %s224 = sphi 0, %s210
      %s230 = sphi 0, %s232
      %s233 = sphi 0, %s230
      %s234 = sphi 0, %s233
      %s250 = sphi 0, %s234
      %s256 = sphi 0, %s258
      %s259 = sphi 0, %s256
      %s260 = sphi 0, %s259
      %s276 = sphi 0, %s260
      %s280 = sphi 0, %s280
      %s282 = sphi 0, %s280
      %s283 = sphi 0, %s282
      %s297 = sphi 0, %s283
      %s305 = sphi 0, %s307
      %s308 = sphi 0, %s305
      %s309 = sphi 0, %s308
      %s325 = sphi 0, %s309
      %s331 = sphi 0, %s333
      %s334 = sphi 0, %s331
      %s335 = sphi 0, %s334
      %s351 = sphi 0, %s335
    $region4: #{tpu_custom_call.1} parent=1 // loop_header_branch
      %33 = sbr.rel (%p31) target = $region8
    $region5: #{tpu_custom_call.1} parent=1 // loop_body
      %s35 = ssub.s32 %s30, 1
      %s36 = ssub.s32 %s30, 2
      %s43 = sadd.s32 1, %s38
      %p44 = scmp.ge.s32.totalorder %s43, 4
      %s45 = scalar_select %p44, 0, %s43
      %s46 = sadd.s32 1, %s37
      %s47 = scalar_select %p44, %s46, %s37
      %p48 = scmp.ge.s32.totalorder %s47, 1
      %s49 = scalar_select %p48, 0, %s47
      %s50 = ssub.s32 %s37, %s49
      %p51 = scmp.eq.s32.totalorder %s50, 0
      %s53 = sadd.s32 %s52, 1
      %s54 = scalar_select %p51, %s52, %s53
      %p57 = pneg %p51
      %p58 = scmp.eq.s32.totalorder %s30, 3
      %p59 = por %p57, %p58
      %p60 = scmp.ne.s32.totalorder %s52, %s55
      %p61 = scmp.eq.s32.totalorder %s30, 0
      %p62 = por %p60, %p61
      %p63 = scmp.ne.s32.totalorder %s52, %s55
      %p64 = scmp.eq.s32.totalorder %s35, 3
      %p65 = por %p63, %p64
      %p66 = scmp.ne.s32.totalorder %s55, %s56
      %p67 = scmp.eq.s32.totalorder %s35, 0
      %p68 = por %p66, %p67
      %p69 = scmp.ne.s32.totalorder %s55, %s56
      %p70 = scmp.eq.s32.totalorder %s36, 3
      %p71 = por %p69, %p70
      %p73 = scmp.ne.s32.totalorder %s56, %s72
      %p74 = scmp.eq.s32.totalorder %s36, 0
      %p75 = por %p73, %p74
      %s76 = ssub.s32 %s37, %s49
      %p77 = scmp.eq.s32.totalorder %s76, 0
      %s79 = sadd.s32 %s78, 1
      %s80 = scalar_select %p77, %s78, %s79
      %p83 = pneg %p77
      %p84 = scmp.eq.s32.totalorder %s30, 3
      %p85 = por %p83, %p84
      %p86 = scmp.ne.s32.totalorder %s78, %s81
      %p87 = scmp.eq.s32.totalorder %s30, 0
      %p88 = por %p86, %p87
      %p89 = scmp.ne.s32.totalorder %s78, %s81
      %p90 = scmp.eq.s32.totalorder %s35, 3
      %p91 = por %p89, %p90
      %p92 = scmp.ne.s32.totalorder %s81, %s82
      %p93 = scmp.eq.s32.totalorder %s35, 0
      %p94 = por %p92, %p93
      %p95 = scmp.ne.s32.totalorder %s81, %s82
      %p96 = scmp.eq.s32.totalorder %s36, 3
      %p97 = por %p95, %p96
      %p99 = scmp.ne.s32.totalorder %s82, %s98
      %p100 = scmp.eq.s32.totalorder %s36, 0
      %p101 = por %p99, %p100
      %s103 = sadd.s32 %s102, 1
      %p106 = scmp.eq.s32.totalorder %s30, 3
      %p107 = scmp.ne.s32.totalorder %s102, %s104
      %p108 = scmp.eq.s32.totalorder %s30, 0
      %p109 = por %p107, %p108
      %p110 = scmp.ne.s32.totalorder %s102, %s104
      %p111 = scmp.eq.s32.totalorder %s35, 3
      %p112 = por %p110, %p111
      %p113 = scmp.ne.s32.totalorder %s104, %s105
      %p114 = scmp.eq.s32.totalorder %s35, 0
      %p115 = por %p113, %p114
      %p116 = scmp.ne.s32.totalorder %s104, %s105
      %p117 = scmp.eq.s32.totalorder %s36, 3
      %p118 = por %p116, %p117
      %p120 = scmp.ne.s32.totalorder %s105, %s119
      %p121 = scmp.eq.s32.totalorder %s36, 0
      %p122 = por %p120, %p121
      %s124 = sadd.s32 %s123, 1
      %p127 = scmp.eq.s32.totalorder %s30, 3
      %p128 = scmp.ne.s32.totalorder %s123, %s125
      %p129 = scmp.eq.s32.totalorder %s30, 0
      %p130 = por %p128, %p129
      %p131 = scmp.ne.s32.totalorder %s123, %s125
      %p132 = scmp.eq.s32.totalorder %s35, 3
      %p133 = por %p131, %p132
      %p134 = scmp.ne.s32.totalorder %s125, %s126
      %p135 = scmp.eq.s32.totalorder %s35, 0
      %p136 = por %p134, %p135
      %p137 = scmp.ne.s32.totalorder %s125, %s126
      %p138 = scmp.eq.s32.totalorder %s36, 3
      %p139 = por %p137, %p138
      %p141 = scmp.ne.s32.totalorder %s126, %s140
      %p142 = scmp.eq.s32.totalorder %s36, 0
      %p143 = por %p141, %p142
      %s145 = sadd.s32 %s144, 1
      %p148 = scmp.eq.s32.totalorder %s30, 3
      %p149 = scmp.ne.s32.totalorder %s144, %s146
      %p150 = scmp.eq.s32.totalorder %s30, 0
      %p151 = por %p149, %p150
      %p152 = scmp.ne.s32.totalorder %s144, %s146
      %p153 = scmp.eq.s32.totalorder %s35, 3
      %p154 = por %p152, %p153
      %p155 = scmp.ne.s32.totalorder %s146, %s147
      %p156 = scmp.eq.s32.totalorder %s35, 0
      %p157 = por %p155, %p156
      %p158 = scmp.ne.s32.totalorder %s146, %s147
      %p159 = scmp.eq.s32.totalorder %s36, 3
      %p160 = por %p158, %p159
      %p162 = scmp.ne.s32.totalorder %s147, %s161
      %p163 = scmp.eq.s32.totalorder %s36, 0
      %p164 = por %p162, %p163
      %s166 = sadd.s32 %s165, 1
      %p169 = scmp.eq.s32.totalorder %s30, 3
      %p170 = scmp.ne.s32.totalorder %s165, %s167
      %p171 = scmp.eq.s32.totalorder %s30, 0
      %p172 = por %p170, %p171
      %p173 = scmp.ne.s32.totalorder %s165, %s167
      %p174 = scmp.eq.s32.totalorder %s35, 3
      %p175 = por %p173, %p174
      %p176 = scmp.ne.s32.totalorder %s167, %s168
      %p177 = scmp.eq.s32.totalorder %s35, 0
      %p178 = por %p176, %p177
      %p179 = scmp.ne.s32.totalorder %s167, %s168
      %p180 = scmp.eq.s32.totalorder %s36, 3
      %p181 = por %p179, %p180
      %p183 = scmp.ne.s32.totalorder %s168, %s182
      %p184 = scmp.eq.s32.totalorder %s36, 0
      %p185 = por %p183, %p184
      %s187 = sadd.s32 %s186, 1
      %p190 = scmp.eq.s32.totalorder %s30, 3
      %p191 = scmp.ne.s32.totalorder %s186, %s188
      %p192 = scmp.eq.s32.totalorder %s30, 0
      %p193 = por %p191, %p192
      %p194 = scmp.ne.s32.totalorder %s186, %s188
      %p195 = scmp.eq.s32.totalorder %s35, 3
      %p196 = por %p194, %p195
      %p197 = scmp.ne.s32.totalorder %s188, %s189
      %p198 = scmp.eq.s32.totalorder %s35, 0
      %p199 = por %p197, %p198
      %p200 = scmp.ne.s32.totalorder %s188, %s189
      %p201 = scmp.eq.s32.totalorder %s36, 3
      %p202 = por %p200, %p201
      %p204 = scmp.ne.s32.totalorder %s189, %s203
      %p205 = scmp.eq.s32.totalorder %s36, 0
      %p206 = por %p204, %p205
      %s208 = sadd.s32 %s207, 1
      %p211 = scmp.eq.s32.totalorder %s30, 3
      %p212 = scmp.ne.s32.totalorder %s207, %s209
      %p213 = scmp.eq.s32.totalorder %s30, 0
      %p214 = por %p212, %p213
      %p215 = scmp.ne.s32.totalorder %s207, %s209
      %p216 = scmp.eq.s32.totalorder %s35, 3
      %p217 = por %p215, %p216
      %p218 = scmp.ne.s32.totalorder %s209, %s210
      %p219 = scmp.eq.s32.totalorder %s35, 0
      %p220 = por %p218, %p219
      %p221 = scmp.ne.s32.totalorder %s209, %s210
      %p222 = scmp.eq.s32.totalorder %s36, 3
      %p223 = por %p221, %p222
      %p225 = scmp.ne.s32.totalorder %s210, %s224
      %p226 = scmp.eq.s32.totalorder %s36, 0
      %p227 = por %p225, %p226
      %s228 = ssub.s32 %s38, %s45
      %p229 = scmp.eq.s32.totalorder %s228, 0
      %s231 = sadd.s32 %s230, 1
      %s232 = scalar_select %p229, %s230, %s231
      %p235 = pneg %p229
      %p236 = scmp.eq.s32.totalorder %s30, 3
      %p237 = por %p235, %p236
      %p238 = scmp.ne.s32.totalorder %s230, %s233
      %p239 = scmp.eq.s32.totalorder %s30, 0
      %p240 = por %p238, %p239
      %p241 = scmp.ne.s32.totalorder %s230, %s233
      %p242 = scmp.eq.s32.totalorder %s35, 3
      %p243 = por %p241, %p242
      %p244 = scmp.ne.s32.totalorder %s233, %s234
      %p245 = scmp.eq.s32.totalorder %s35, 0
      %p246 = por %p244, %p245
      %p247 = scmp.ne.s32.totalorder %s233, %s234
      %p248 = scmp.eq.s32.totalorder %s36, 3
      %p249 = por %p247, %p248
      %p251 = scmp.ne.s32.totalorder %s234, %s250
      %p252 = scmp.eq.s32.totalorder %s36, 0
      %p253 = por %p251, %p252
      %s254 = ssub.s32 %s38, %s45
      %p255 = scmp.eq.s32.totalorder %s254, 0
      %s257 = sadd.s32 %s256, 1
      %s258 = scalar_select %p255, %s256, %s257
      %p261 = pneg %p255
      %p262 = scmp.eq.s32.totalorder %s30, 3
      %p263 = por %p261, %p262
      %p264 = scmp.ne.s32.totalorder %s256, %s259
      %p265 = scmp.eq.s32.totalorder %s30, 0
      %p266 = por %p264, %p265
      %p267 = scmp.ne.s32.totalorder %s256, %s259
      %p268 = scmp.eq.s32.totalorder %s35, 3
      %p269 = por %p267, %p268
      %p270 = scmp.ne.s32.totalorder %s259, %s260
      %p271 = scmp.eq.s32.totalorder %s35, 0
      %p272 = por %p270, %p271
      %p273 = scmp.ne.s32.totalorder %s259, %s260
      %p274 = scmp.eq.s32.totalorder %s36, 3
      %p275 = por %p273, %p274
      %p277 = scmp.ne.s32.totalorder %s260, %s276
      %p278 = scmp.eq.s32.totalorder %s36, 0
      %p279 = por %p277, %p278
      %s281 = sadd.s32 %s280, 1
      %p284 = scmp.eq.s32.totalorder %s30, 3
      %p285 = scmp.ne.s32.totalorder %s280, %s282
      %p286 = scmp.eq.s32.totalorder %s30, 0
      %p287 = por %p285, %p286
      %p288 = scmp.ne.s32.totalorder %s280, %s282
      %p289 = scmp.eq.s32.totalorder %s35, 3
      %p290 = por %p288, %p289
      %p291 = scmp.ne.s32.totalorder %s282, %s283
      %p292 = scmp.eq.s32.totalorder %s35, 0
      %p293 = por %p291, %p292
      %p294 = scmp.ne.s32.totalorder %s282, %s283
      %p295 = scmp.eq.s32.totalorder %s36, 3
      %p296 = por %p294, %p295
      %p298 = scmp.ne.s32.totalorder %s283, %s297
      %p299 = scmp.eq.s32.totalorder %s36, 0
      %p300 = por %p298, %p299
      %s301 = ssub.s32 %s37, %s49
      %s302 = ssub.s32 %s38, %s45
      %s303 = sor.u32 %s301, %s302
      %p304 = scmp.eq.s32.totalorder %s303, 0
      %s306 = sadd.s32 %s305, 1
      %s307 = scalar_select %p304, %s305, %s306
      %p310 = pneg %p304
      %p311 = scmp.eq.s32.totalorder %s30, 3
      %p312 = por %p310, %p311
      %p313 = scmp.ne.s32.totalorder %s305, %s308
      %p314 = scmp.eq.s32.totalorder %s30, 0
      %p315 = por %p313, %p314
      %p316 = scmp.ne.s32.totalorder %s305, %s308
      %p317 = scmp.eq.s32.totalorder %s35, 3
      %p318 = por %p316, %p317
      %p319 = scmp.ne.s32.totalorder %s308, %s309
      %p320 = scmp.eq.s32.totalorder %s35, 0
      %p321 = por %p319, %p320
      %p322 = scmp.ne.s32.totalorder %s308, %s309
      %p323 = scmp.eq.s32.totalorder %s36, 3
      %p324 = por %p322, %p323
      %p326 = scmp.ne.s32.totalorder %s309, %s325
      %p327 = scmp.eq.s32.totalorder %s36, 0
      %p328 = por %p326, %p327
      %s329 = ssub.s32 %s37, %s49
      %p330 = scmp.eq.s32.totalorder %s329, 0
      %s332 = sadd.s32 %s331, 1
      %s333 = scalar_select %p330, %s331, %s332
      %p336 = pneg %p330
      %p337 = scmp.eq.s32.totalorder %s30, 3
      %p338 = por %p336, %p337
      %p339 = scmp.ne.s32.totalorder %s331, %s334
      %p340 = scmp.eq.s32.totalorder %s30, 0
      %p341 = por %p339, %p340
      %p342 = scmp.ne.s32.totalorder %s331, %s334
      %p343 = scmp.eq.s32.totalorder %s35, 3
      %p344 = por %p342, %p343
      %p345 = scmp.ne.s32.totalorder %s334, %s335
      %p346 = scmp.eq.s32.totalorder %s35, 0
      %p347 = por %p345, %p346
      %p348 = scmp.ne.s32.totalorder %s334, %s335
      %p349 = scmp.eq.s32.totalorder %s36, 3
      %p350 = por %p348, %p349
      %p352 = scmp.ne.s32.totalorder %s335, %s351
      %p353 = scmp.eq.s32.totalorder %s36, 0
      %p354 = por %p352, %p353
      %p355 = scmp.le.s32.totalorder 1, %s30
      %p356 = scmp.lt.s32.totalorder %s30, 5
      %p357 = pnand %p355, %p356
      %p358 = pneg %p357
      // Predicated region
      $region9: #{tpu_custom_call.1} parent=5 // pred_check
        _
      $region10: #{tpu_custom_call.1} parent=5 // pred_check_branch
        %360 = sbr.rel (%p357) target = $region12
      $region11: #{tpu_custom_call.1} parent=5 // pred_region
        %s361 = ssub.s32 %s30, 1
        // Predicated region
        $region13: #{tpu_custom_call.1} parent=11 // pred_check
          %p362 = pneg %p68
        $region14: #{tpu_custom_call.1} parent=11 // pred_check_branch
          %364 = sbr.rel (%p362) target = $region16
        $region15: #{tpu_custom_call.1} parent=11 // pred_region
          %s365 = smul.u32 2, %s39
          %367 = vsyncadd [#allocation5], 0
          %s368 = smul.addr %s365, 4
          %s369 = scalar_lea.hbm %s0, %s368
          %s370 = sshll.u32 %s369, 4
          %s371 = int_to_ptr.hbm [resolvable:$true] %s370
          %s372 = sshll.u32 [#allocation4], 4
          %s373 = int_to_ptr.vmem [resolvable:$true] %s372
          %378 = dma.hbm_to_vmem [thread:$0]  %s371, 128, %s373, [#allocation5], 64, 64, 4
        $region16: #{tpu_custom_call.1} parent=11 // pred_fallthru
          _
        // Predicated region
        $region17: #{tpu_custom_call.1} parent=11 // pred_check
          %p379 = pneg %p94
        $region18: #{tpu_custom_call.1} parent=11 // pred_check_branch
          %381 = sbr.rel (%p379) target = $region20
        $region19: #{tpu_custom_call.1} parent=11 // pred_region
          %s382 = smul.u32 2, %s39
          %384 = vsyncadd [#allocation8], 0
          %s385 = smul.addr %s382, 4
          %s386 = scalar_lea.hbm %s1, %s385
          %s387 = sshll.u32 %s386, 4
          %s388 = int_to_ptr.hbm [resolvable:$true] %s387
          %s389 = sshll.u32 [#allocation7], 4
          %s390 = int_to_ptr.vmem [resolvable:$true] %s389
          %395 = dma.hbm_to_vmem [thread:$0]  %s388, 128, %s390, [#allocation8], 64, 64, 4
        $region20: #{tpu_custom_call.1} parent=11 // pred_fallthru
          _
        // Predicated region
        $region21: #{tpu_custom_call.1} parent=11 // pred_check
          %p396 = pneg %p115
        $region22: #{tpu_custom_call.1} parent=11 // pred_check_branch
          %398 = sbr.rel (%p396) target = $region24
        $region23: #{tpu_custom_call.1} parent=11 // pred_region
          %400 = vsyncadd [#allocation8], 0
          %s401 = sshll.u32 %s2, 4
          %s402 = int_to_ptr.hbm [resolvable:$true] %s401
          %s403 = sshll.u32 [#allocation9], 4
          %s404 = int_to_ptr.vmem [resolvable:$true] %s403
          %409 = dma.hbm_to_vmem [thread:$0]  %s402, 256, %s404, [#allocation8], 64, 64, 4
        $region24: #{tpu_custom_call.1} parent=11 // pred_fallthru
          _
        // Predicated region
        $region25: #{tpu_custom_call.1} parent=11 // pred_check
          %p410 = pneg %p136
        $region26: #{tpu_custom_call.1} parent=11 // pred_check_branch
          %412 = sbr.rel (%p410) target = $region28
        $region27: #{tpu_custom_call.1} parent=11 // pred_region
          _
        $region28: #{tpu_custom_call.1} parent=11 // pred_fallthru
          _
        // Predicated region
        $region29: #{tpu_custom_call.1} parent=11 // pred_check
          %p413 = pneg %p157
        $region30: #{tpu_custom_call.1} parent=11 // pred_check_branch
          %415 = sbr.rel (%p413) target = $region32
        $region31: #{tpu_custom_call.1} parent=11 // pred_region
          %417 = vsyncadd [#allocation11], 0
          %s418 = sshll.u32 %s4, 4
          %s419 = int_to_ptr.hbm [resolvable:$true] %s418
          %s420 = sshll.u32 [#allocation10], 4
          %s421 = int_to_ptr.vmem [resolvable:$true] %s420
          %426 = dma.hbm_to_vmem [thread:$0]  %s419, 256, %s421, [#allocation11], 64, 64, 4
        $region32: #{tpu_custom_call.1} parent=11 // pred_fallthru
          _
        // Predicated region
        $region33: #{tpu_custom_call.1} parent=11 // pred_check
          %p427 = pneg %p178
        $region34: #{tpu_custom_call.1} parent=11 // pred_check_branch
          %429 = sbr.rel (%p427) target = $region36
        $region35: #{tpu_custom_call.1} parent=11 // pred_region
          _
        $region36: #{tpu_custom_call.1} parent=11 // pred_fallthru
          _
        // Predicated region
        $region37: #{tpu_custom_call.1} parent=11 // pred_check
          %p430 = pneg %p199
        $region38: #{tpu_custom_call.1} parent=11 // pred_check_branch
          %432 = sbr.rel (%p430) target = $region40
        $region39: #{tpu_custom_call.1} parent=11 // pred_region
          %434 = vsyncadd [#allocation11], 0
          %s435 = sshll.u32 %s6, 4
          %s436 = int_to_ptr.hbm [resolvable:$true] %s435
          %s437 = sshll.u32 [#allocation12], 4
          %s438 = int_to_ptr.vmem [resolvable:$true] %s437
          %443 = dma.hbm_to_vmem [thread:$0]  %s436, 256, %s438, [#allocation11], 64, 64, 4
        $region40: #{tpu_custom_call.1} parent=11 // pred_fallthru
          _
        // Predicated region
        $region41: #{tpu_custom_call.1} parent=11 // pred_check
          %p444 = pneg %p220
        $region42: #{tpu_custom_call.1} parent=11 // pred_check_branch
          %446 = sbr.rel (%p444) target = $region44
        $region43: #{tpu_custom_call.1} parent=11 // pred_region
          _
        $region44: #{tpu_custom_call.1} parent=11 // pred_fallthru
          _
        // Predicated region
        $region45: #{tpu_custom_call.1} parent=11 // pred_check
          %p447 = pneg %p293
        $region46: #{tpu_custom_call.1} parent=11 // pred_check_branch
          %449 = sbr.rel (%p447) target = $region48
        $region47: #{tpu_custom_call.1} parent=11 // pred_region
          %451 = vsyncadd [#allocation17], 0
          %s452 = sshll.u32 %s10, 4
          %s453 = int_to_ptr.hbm [resolvable:$true] %s452
          %s454 = sshll.u32 [#allocation16], 4
          %s455 = int_to_ptr.vmem [resolvable:$true] %s454
          %460 = dma.hbm_to_vmem [thread:$0]  %s453, 5120, %s455, [#allocation17], 2560, 2560, 160
        $region48: #{tpu_custom_call.1} parent=11 // pred_fallthru
          _
      $region12: #{tpu_custom_call.1} parent=5 // pred_fallthru
        _
      %p461 = scmp.lt.s32.totalorder %s30, 4
      // Predicated region
      $region49: #{tpu_custom_call.1} parent=5 // pred_check
        %p462 = pneg %p461
      $region50: #{tpu_custom_call.1} parent=5 // pred_check_branch
        %464 = sbr.rel (%p462) target = $region52
      $region51: #{tpu_custom_call.1} parent=5 // pred_region
        // Predicated region
        $region53: #{tpu_custom_call.1} parent=51 // pred_check
          %p465 = pneg %p240
        $region54: #{tpu_custom_call.1} parent=51 // pred_check_branch
          %467 = sbr.rel (%p465) target = $region56
        $region55: #{tpu_custom_call.1} parent=51 // pred_region
          %s468 = sand.u32 %s30, 1
          %s469 = scalar_lea.sflag [#allocation14], %s468
          %s470 = sand.u32 %s230, 1
          %s471 = smul.addr %s470, 160
          %s472 = scalar_lea.vmem [#allocation13], %s471
          %s473 = smul.u32 10, %s38
          %475 = vsyncadd %s469, 0
          %s476 = smul.addr %s473, 4
          %s477 = scalar_lea.hbm %s8, %s476
          %s478 = sshll.u32 %s477, 4
          %s479 = int_to_ptr.hbm [resolvable:$true] %s478
          %s480 = sshll.u32 %s472, 4
          %s481 = int_to_ptr.vmem [resolvable:$true] %s480
          %486 = dma.hbm_to_vmem [thread:$0]  %s479, 2560, %s481, %s469, 2560, 640, 40
        $region56: #{tpu_custom_call.1} parent=51 // pred_fallthru
          _
        // Predicated region
        $region57: #{tpu_custom_call.1} parent=51 // pred_check
          %p487 = pneg %p266
        $region58: #{tpu_custom_call.1} parent=51 // pred_check_branch
          %489 = sbr.rel (%p487) target = $region60
        $region59: #{tpu_custom_call.1} parent=51 // pred_region
          %s490 = sand.u32 %s30, 1
          %s491 = scalar_lea.sflag [#allocation14], %s490
          %s492 = sand.u32 %s256, 1
          %s493 = smul.addr %s492, 10
          %s494 = scalar_lea.vmem [#allocation15], %s493
          %s495 = smul.u32 10, %s38
          %497 = vsyncadd %s491, 0
          %s498 = scalar_lea.hbm %s9, %s495
          %s500 = sshll.u32 %s498, 4
          %s501 = int_to_ptr.hbm [resolvable:$true] %s500
          %s502 = sshll.u32 %s494, 4
          %s503 = int_to_ptr.vmem [resolvable:$true] %s502
          %505 = dma.hbm_to_vmem [thread:$0]  %s501, 160, %s503, %s491
        $region60: #{tpu_custom_call.1} parent=51 // pred_fallthru
          _
      $region52: #{tpu_custom_call.1} parent=5 // pred_fallthru
        _
      %p506 = scmp.le.s32.totalorder 1, %s30
      %p507 = scmp.lt.s32.totalorder %s30, 5
      %p508 = pnand %p506, %p507
      %p509 = pneg %p508
      // Predicated region
      $region61: #{tpu_custom_call.1} parent=5 // pred_check
        _
      $region62: #{tpu_custom_call.1} parent=5 // pred_check_branch
        %511 = sbr.rel (%p508) target = $region64
      $region63: #{tpu_custom_call.1} parent=5 // pred_region
        %s512 = ssub.s32 %s30, 1
        // Predicated region
        $region65: #{tpu_custom_call.1} parent=63 // pred_check
          %p513 = pneg %p68
        $region66: #{tpu_custom_call.1} parent=63 // pred_check_branch
          %515 = sbr.rel (%p513) target = $region68
        $region67: #{tpu_custom_call.1} parent=63 // pred_region
          %517 = dma.done [#allocation5], 128
        $region68: #{tpu_custom_call.1} parent=63 // pred_fallthru
          _
        // Predicated region
        $region69: #{tpu_custom_call.1} parent=63 // pred_check
          %p518 = pneg %p94
        $region70: #{tpu_custom_call.1} parent=63 // pred_check_branch
          %520 = sbr.rel (%p518) target = $region72
        $region71: #{tpu_custom_call.1} parent=63 // pred_region
          %522 = dma.done [#allocation8], 128
        $region72: #{tpu_custom_call.1} parent=63 // pred_fallthru
          _
        // Predicated region
        $region73: #{tpu_custom_call.1} parent=63 // pred_check
          %p523 = pneg %p115
        $region74: #{tpu_custom_call.1} parent=63 // pred_check_branch
          %525 = sbr.rel (%p523) target = $region76
        $region75: #{tpu_custom_call.1} parent=63 // pred_region
          %527 = dma.done [#allocation8], 256
        $region76: #{tpu_custom_call.1} parent=63 // pred_fallthru
          _
        // Predicated region
        $region77: #{tpu_custom_call.1} parent=63 // pred_check
          %p528 = pneg %p157
        $region78: #{tpu_custom_call.1} parent=63 // pred_check_branch
          %530 = sbr.rel (%p528) target = $region80
        $region79: #{tpu_custom_call.1} parent=63 // pred_region
          %532 = dma.done [#allocation11], 256
        $region80: #{tpu_custom_call.1} parent=63 // pred_fallthru
          _
        // Predicated region
        $region81: #{tpu_custom_call.1} parent=63 // pred_check
          %p533 = pneg %p199
        $region82: #{tpu_custom_call.1} parent=63 // pred_check_branch
          %535 = sbr.rel (%p533) target = $region84
        $region83: #{tpu_custom_call.1} parent=63 // pred_region
          %537 = dma.done [#allocation11], 256
        $region84: #{tpu_custom_call.1} parent=63 // pred_fallthru
          _
        %s538 = sand.u32 %s35, 1
        %s539 = scalar_lea.sflag [#allocation14], %s538
        %s540 = sand.u32 %s233, 1
        %s541 = smul.addr %s540, 160
        %s542 = scalar_lea.vmem [#allocation13], %s541
        // Predicated region
        $region85: #{tpu_custom_call.1} parent=63 // pred_check
          %p543 = pneg %p246
        $region86: #{tpu_custom_call.1} parent=63 // pred_check_branch
          %545 = sbr.rel (%p543) target = $region88
        $region87: #{tpu_custom_call.1} parent=63 // pred_region
          %547 = dma.done %s539, 2560
        $region88: #{tpu_custom_call.1} parent=63 // pred_fallthru
          _
        %s548 = sand.u32 %s35, 1
        %s549 = scalar_lea.sflag [#allocation14], %s548
        %s550 = sand.u32 %s259, 1
        %s551 = smul.addr %s550, 10
        %s552 = scalar_lea.vmem [#allocation15], %s551
        // Predicated region
        $region89: #{tpu_custom_call.1} parent=63 // pred_check
          %p553 = pneg %p272
        $region90: #{tpu_custom_call.1} parent=63 // pred_check_branch
          %555 = sbr.rel (%p553) target = $region92
        $region91: #{tpu_custom_call.1} parent=63 // pred_region
          %557 = dma.done %s549, 160
        $region92: #{tpu_custom_call.1} parent=63 // pred_fallthru
          _
        // Predicated region
        $region93: #{tpu_custom_call.1} parent=63 // pred_check
          %p558 = pneg %p293
        $region94: #{tpu_custom_call.1} parent=63 // pred_check_branch
          %560 = sbr.rel (%p558) target = $region96
        $region95: #{tpu_custom_call.1} parent=63 // pred_region
          %562 = dma.done [#allocation17], 5120
        $region96: #{tpu_custom_call.1} parent=63 // pred_fallthru
          _
        %p563 = pneg %p68
        %p564 = pneg %p65
        %p565 = pneg %p94
        %p566 = pneg %p91
        %p567 = pneg %p115
        %p568 = pneg %p112
        %p569 = pneg %p136
        %p570 = pneg %p133
        %p571 = pneg %p157
        %p572 = pneg %p154
        %p573 = pneg %p178
        %p574 = pneg %p175
        %p575 = pneg %p199
        %p576 = pneg %p196
        %p577 = pneg %p220
        %p578 = pneg %p217
        %s579 = sand.u32 %s35, 1
        %s580 = scalar_lea.sflag [#allocation14], %s579
        %s581 = sand.u32 %s233, 1
        %s582 = smul.addr %s581, 160
        %s583 = scalar_lea.vmem [#allocation13], %s582
        %p584 = pneg %p246
        %p585 = pneg %p243
        %s586 = sand.u32 %s35, 1
        %s587 = scalar_lea.sflag [#allocation14], %s586
        %s588 = sand.u32 %s259, 1
        %s589 = smul.addr %s588, 10
        %s590 = scalar_lea.vmem [#allocation15], %s589
        %p591 = pneg %p272
        %p592 = pneg %p269
        %p593 = pneg %p293
        %p594 = pneg %p290
        %p595 = pneg %p321
        %p596 = pneg %p318
        %s597 = sand.u32 %s308, 1
        %s598 = scalar_lea.sflag [#allocation6], %s597
        %s599 = sand.u32 %s308, 1
        %s600 = smul.addr %s599, 160
        %s601 = scalar_lea.vmem [#allocation18], %s600
        %p602 = pneg %p347
        %p603 = pneg %p344
        %s604 = smul.u32 2, %s39
        %s605 = smul.u32 2, %s39
        %s606 = smul.u32 10, %s40
        %s607 = smul.u32 10, %s40
        %s608 = smul.u32 2, %s39
        %s609 = smul.u32 10, %s40
        %s610 = smul.u32 2, %s39
        %p612 = scmp.eq.s32.totalorder %s40, 0
        // Predicated region
        $region97: #{tpu_custom_call.1} parent=63 // pred_check
          %p613 = pneg %p612
        $region98: #{tpu_custom_call.1} parent=63 // pred_check_branch
          %615 = sbr.rel (%p613) target = $region100
        $region99: #{tpu_custom_call.1} parent=63 // pred_region
          %v616 = vld [vmem:[#allocation4] sm:$0xf]
          %v617 = vld [vmem:[#allocation4 + $0x4] sm:$0xf]
          %v618 = vld [vmem:[#allocation9] sm:$0xf]
          %v619 = vld [vmem:[#allocation9 + $0x4] sm:$0xf]
          %v620 = vld [vmem:[#allocation9 + $0x8] sm:$0xf]
          %v621 = vld [vmem:[#allocation9 + $0xc] sm:$0xf]
          %v622 = vld [vmem:[%s3] sm:$0x1]
          %v624 = vperm.slane %v622, 0
          %v628 = vunpack.c.l.b16 %v616
          %v629 = vunpack.c.l.b16 %v617
          %v630 = vpack.c.b16 %v629, %v628
          %v635 = vunpack.c.l.b16 %v618
          %v636 = vunpack.c.l.b16 %v619
          %v637 = vunpack.c.l.b16 %v620
          %v638 = vunpack.c.l.b16 %v621
          %v639 = vpack.c.b16 %v636, %v635
          %v640 = vpack.c.b16 %v638, %v637
          %vm643 = vcmask 261120
          %v645 = vsel %vm643, %v630, 0
          %647 = vmatpush.bf16.msra.mxu0 0
          %648 = vmatpush.bf16.msra.mxu0 0
          %649 = vmatpush.bf16.msra.mxu0 0
          %650 = vmatpush.bf16.msra.mxu0 0
          %651 = vmatpush.bf16.msra.mxu0 0
          %652 = vmatpush.bf16.msra.mxu0 0
          %653 = vmatpush.bf16.msra.mxu0 %v640
          %654 = vmatpush.bf16.msra.mxu0 %v639
          %655 = vmatmul.bf16.gmra.mxu0 %v645
          %v656 = vpop.f32.mrf.mxu0
          %v657 = vadd.f32 %v624, %v656
          %v658 = vpop.f32.mrf.mxu0
          %v659 = vadd.f32 %v624, %v658
          %660 = vdwg.mxu0
          %v661 = vld [vmem:[#allocation7] sm:$0xf]
          %v662 = vld [vmem:[#allocation7 + $0x4] sm:$0xf]
          %v663 = vld [vmem:[#allocation10] sm:$0xf]
          %v664 = vld [vmem:[#allocation10 + $0x4] sm:$0xf]
          %v665 = vld [vmem:[#allocation10 + $0x8] sm:$0xf]
          %v666 = vld [vmem:[#allocation10 + $0xc] sm:$0xf]
          %v667 = vld [vmem:[%s5] sm:$0x1]
          %v669 = vperm.slane %v667, 0
          %v673 = vunpack.c.l.b16 %v661
          %v674 = vunpack.c.l.b16 %v662
          %v675 = vpack.c.b16 %v674, %v673
          %v680 = vunpack.c.l.b16 %v663
          %v681 = vunpack.c.l.b16 %v664
          %v682 = vunpack.c.l.b16 %v665
          %v683 = vunpack.c.l.b16 %v666
          %v684 = vpack.c.b16 %v681, %v680
          %v685 = vpack.c.b16 %v683, %v682
          %v689 = vsel %vm643, %v675, 0
          %691 = vmatpush.bf16.msra.mxu0 0
          %692 = vmatpush.bf16.msra.mxu0 0
          %693 = vmatpush.bf16.msra.mxu0 0
          %694 = vmatpush.bf16.msra.mxu0 0
          %695 = vmatpush.bf16.msra.mxu0 0
          %696 = vmatpush.bf16.msra.mxu0 0
          %697 = vmatpush.bf16.msra.mxu0 %v685
          %698 = vmatpush.bf16.msra.mxu0 %v684
          %699 = vmatmul.bf16.gmra.mxu0 %v689
          %v700 = vpop.f32.mrf.mxu0
          %v701 = vadd.f32 %v669, %v700
          %v702 = vpop.f32.mrf.mxu0
          %v703 = vadd.f32 %v669, %v702
          %704 = vdwg.mxu0
          %v705 = vpack.c.bf16 %v703, %v701
          %v706 = vld [vmem:[#allocation12] sm:$0xf]
          %v707 = vld [vmem:[#allocation12 + $0x4] sm:$0xf]
          %v708 = vld [vmem:[#allocation12 + $0x8] sm:$0xf]
          %v709 = vld [vmem:[#allocation12 + $0xc] sm:$0xf]
          %v710 = vld [vmem:[%s7] sm:$0x1]
          %v712 = vperm.slane %v710, 0
          %v718 = vunpack.c.l.b16 %v706
          %v719 = vunpack.c.l.b16 %v707
          %v720 = vunpack.c.l.b16 %v708
          %v721 = vunpack.c.l.b16 %v709
          %v722 = vpack.c.b16 %v719, %v718
          %v723 = vpack.c.b16 %v721, %v720
          %v727 = vsel %vm643, %v705, 0
          %729 = vmatpush.bf16.msra.mxu0 0
          %730 = vmatpush.bf16.msra.mxu0 0
          %731 = vmatpush.bf16.msra.mxu0 0
          %732 = vmatpush.bf16.msra.mxu0 0
          %733 = vmatpush.bf16.msra.mxu0 0
          %734 = vmatpush.bf16.msra.mxu0 0
          %735 = vmatpush.bf16.msra.mxu0 %v723
          %736 = vmatpush.bf16.msra.mxu0 %v722
          %737 = vmatmul.bf16.gmra.mxu0 %v727
          %v738 = vpop.f32.mrf.mxu0
          %v739 = vadd.f32 %v712, %v738
          %v740 = vpop.f32.mrf.mxu0
          %v741 = vadd.f32 %v712, %v740
          %742 = vdwg.mxu0
          %v743 = vpack.c.bf16 %v657, %v657
          %v744 = vpack.c.bf16 %v659, %v659
          %vm745 = vcmask 257024
          %746 = vst.msk [vmem:[#allocation2] sm:$0xf] %vm745, %v743
          %747 = vst.msk [vmem:[#allocation2 + $0x4] sm:$0xf] %vm745, %v744
          %v748 = vpack.c.bf16 %v739, %v739
          %v749 = vpack.c.bf16 %v741, %v741
          %vm750 = vcmask 125952
          %751 = vst.msk [vmem:[#allocation3] sm:$0xf] %vm750, %v748
          %752 = vst.msk [vmem:[#allocation3 + $0x4] sm:$0xf] %vm750, %v749
          %753 = vst [vmem:[#allocation19] sm:$0xff] %v739
          %754 = vst [vmem:[#allocation19 + $0x8] sm:$0xff] %v741
        $region100: #{tpu_custom_call.1} parent=63 // pred_fallthru
          _
        %v755 = vld [vmem:[#allocation2] sm:$0xf]
        %v756 = vld [vmem:[#allocation2 + $0x4] sm:$0xf]
        %v757 = vld [vmem:[%s542] sm:$0xff]
        %v758 = vld [vmem:[%s542 + $0x8] sm:$0xff]
        %v759 = vld [vmem:[%s542 + $0x10] sm:$0xff]
        %v760 = vld [vmem:[%s542 + $0x18] sm:$0xff]
        %v761 = vld [vmem:[%s542 + $0x20] sm:$0xff]
        %v762 = vld [vmem:[%s542 + $0x28] sm:$0xff]
        %v763 = vld [vmem:[%s542 + $0x30] sm:$0xff]
        %v764 = vld [vmem:[%s542 + $0x38] sm:$0xff]
        %v765 = vld [vmem:[%s542 + $0x40] sm:$0xff]
        %v766 = vld [vmem:[%s542 + $0x48] sm:$0xff]
        %v767 = vld [vmem:[%s542 + $0x50] sm:$0xff]
        %v768 = vld [vmem:[%s542 + $0x58] sm:$0xff]
        %v769 = vld [vmem:[%s542 + $0x60] sm:$0xff]
        %v770 = vld [vmem:[%s542 + $0x68] sm:$0xff]
        %v771 = vld [vmem:[%s542 + $0x70] sm:$0xff]
        %v772 = vld [vmem:[%s542 + $0x78] sm:$0xff]
        %v773 = vld [vmem:[%s542 + $0x80] sm:$0xff]
        %v774 = vld [vmem:[%s542 + $0x88] sm:$0xff]
        %v775 = vld [vmem:[%s542 + $0x90] sm:$0xff]
        %v776 = vld [vmem:[%s542 + $0x98] sm:$0xff]
        %v777 = vld [vmem:[%s552] sm:$0xff]
        %v778 = vld [vmem:[%s552 + $0x8] sm:$0x3]
        %v781 = vperm.slane %v777, 0
        %v782 = vperm.slane %v777, 1
        %v783 = vperm.slane %v777, 2
        %v784 = vperm.slane %v777, 3
        %v785 = vperm.slane %v777, 4
        %v786 = vperm.slane %v777, 5
        %v787 = vperm.slane %v777, 6
        %v788 = vperm.slane %v777, 7
        %v789 = vperm.slane %v778, 0
        %v790 = vperm.slane %v778, 1
        %v803 = vunpack.c.l.b16 %v755
        %v804 = vunpack.c.l.b16 %v756
        %v805 = vpack.c.b16 %v804, %v803
        %v826 = vunpack.c.l.b16 %v757
        %v827 = vunpack.c.h.b16 %v757
        %v828 = vunpack.c.l.b16 %v758
        %v829 = vunpack.c.h.b16 %v758
        %v830 = vunpack.c.l.b16 %v759
        %v831 = vunpack.c.h.b16 %v759
        %v832 = vunpack.c.l.b16 %v760
        %v833 = vunpack.c.h.b16 %v760
        %v834 = vunpack.c.l.b16 %v761
        %v835 = vunpack.c.h.b16 %v761
        %v836 = vunpack.c.l.b16 %v762
        %v837 = vunpack.c.h.b16 %v762
        %v838 = vunpack.c.l.b16 %v763
        %v839 = vunpack.c.h.b16 %v763
        %v840 = vunpack.c.l.b16 %v764
        %v841 = vunpack.c.h.b16 %v764
        %v842 = vunpack.c.l.b16 %v765
        %v843 = vunpack.c.h.b16 %v765
        %v844 = vunpack.c.l.b16 %v766
        %v845 = vunpack.c.h.b16 %v766
        %v846 = vunpack.c.l.b16 %v767
        %v847 = vunpack.c.h.b16 %v767
        %v848 = vunpack.c.l.b16 %v768
        %v849 = vunpack.c.h.b16 %v768
        %v850 = vunpack.c.l.b16 %v769
        %v851 = vunpack.c.h.b16 %v769
        %v852 = vunpack.c.l.b16 %v770
        %v853 = vunpack.c.h.b16 %v770
        %v854 = vunpack.c.l.b16 %v771
        %v855 = vunpack.c.h.b16 %v771
        %v856 = vunpack.c.l.b16 %v772
        %v857 = vunpack.c.h.b16 %v772
        %v858 = vunpack.c.l.b16 %v773
        %v859 = vunpack.c.h.b16 %v773
        %v860 = vunpack.c.l.b16 %v774
        %v861 = vunpack.c.h.b16 %v774
        %v862 = vunpack.c.l.b16 %v775
        %v863 = vunpack.c.h.b16 %v775
        %v864 = vunpack.c.l.b16 %v776
        %v865 = vunpack.c.h.b16 %v776
        %v866 = vpack.c.b16 %v836, %v826
        %v867 = vpack.c.b16 %v837, %v827
        %v868 = vpack.c.b16 %v838, %v828
        %v869 = vpack.c.b16 %v839, %v829
        %v870 = vpack.c.b16 %v840, %v830
        %v871 = vpack.c.b16 %v841, %v831
        %v872 = vpack.c.b16 %v842, %v832
        %v873 = vpack.c.b16 %v843, %v833
        %v874 = vpack.c.b16 %v844, %v834
        %v875 = vpack.c.b16 %v845, %v835
        %v876 = vpack.c.b16 %v856, %v846
        %v877 = vpack.c.b16 %v857, %v847
        %v878 = vpack.c.b16 %v858, %v848
        %v879 = vpack.c.b16 %v859, %v849
        %v880 = vpack.c.b16 %v860, %v850
        %v881 = vpack.c.b16 %v861, %v851
        %v882 = vpack.c.b16 %v862, %v852
        %v883 = vpack.c.b16 %v863, %v853
        %v884 = vpack.c.b16 %v864, %v854
        %v885 = vpack.c.b16 %v865, %v855
        %vm906 = vcmask 261120
        %v908 = vsel %vm906, %v805, 0
        %910 = vmatpush.bf16.msra.mxu0 0
        %911 = vmatpush.bf16.msra.mxu0 0
        %912 = vmatpush.bf16.msra.mxu0 0
        %913 = vmatpush.bf16.msra.mxu0 0
        %914 = vmatpush.bf16.msra.mxu0 0
        %915 = vmatpush.bf16.msra.mxu0 0
        %916 = vmatpush.bf16.msra.mxu0 %v876
        %917 = vmatpush.bf16.msra.mxu0 %v866
        %918 = vmatmul.bf16.gmra.mxu0 %v908
        %v919 = vpop.f32.mrf.mxu0
        %v920 = vadd.f32 %v781, %v919
        %v921 = vpop.f32.mrf.mxu0
        %v922 = vadd.f32 %v781, %v921
        %923 = vdwg.mxu0
        %924 = vmatpush.bf16.msra.mxu0 0
        %925 = vmatpush.bf16.msra.mxu0 0
        %926 = vmatpush.bf16.msra.mxu0 0
        %927 = vmatpush.bf16.msra.mxu0 0
        %928 = vmatpush.bf16.msra.mxu0 0
        %929 = vmatpush.bf16.msra.mxu0 0
        %930 = vmatpush.bf16.msra.mxu0 %v877
        %931 = vmatpush.bf16.msra.mxu0 %v867
        %932 = vmatmul.bf16.gmra.mxu0 %v908
        %v933 = vpop.f32.mrf.mxu0
        %v934 = vadd.f32 %v782, %v933
        %v935 = vpop.f32.mrf.mxu0
        %v936 = vadd.f32 %v782, %v935
        %937 = vdwg.mxu0
        %938 = vmatpush.bf16.msra.mxu0 0
        %939 = vmatpush.bf16.msra.mxu0 0
        %940 = vmatpush.bf16.msra.mxu0 0
        %941 = vmatpush.bf16.msra.mxu0 0
        %942 = vmatpush.bf16.msra.mxu0 0
        %943 = vmatpush.bf16.msra.mxu0 0
        %944 = vmatpush.bf16.msra.mxu0 %v878
        %945 = vmatpush.bf16.msra.mxu0 %v868
        %946 = vmatmul.bf16.gmra.mxu0 %v908
        %v947 = vpop.f32.mrf.mxu0
        %v948 = vadd.f32 %v783, %v947
        %v949 = vpop.f32.mrf.mxu0
        %v950 = vadd.f32 %v783, %v949
        %951 = vdwg.mxu0
        %952 = vmatpush.bf16.msra.mxu0 0
        %953 = vmatpush.bf16.msra.mxu0 0
        %954 = vmatpush.bf16.msra.mxu0 0
        %955 = vmatpush.bf16.msra.mxu0 0
        %956 = vmatpush.bf16.msra.mxu0 0
        %957 = vmatpush.bf16.msra.mxu0 0
        %958 = vmatpush.bf16.msra.mxu0 %v879
        %959 = vmatpush.bf16.msra.mxu0 %v869
        %960 = vmatmul.bf16.gmra.mxu0 %v908
        %v961 = vpop.f32.mrf.mxu0
        %v962 = vadd.f32 %v784, %v961
        %v963 = vpop.f32.mrf.mxu0
        %v964 = vadd.f32 %v784, %v963
        %965 = vdwg.mxu0
        %966 = vmatpush.bf16.msra.mxu0 0
        %967 = vmatpush.bf16.msra.mxu0 0
        %968 = vmatpush.bf16.msra.mxu0 0
        %969 = vmatpush.bf16.msra.mxu0 0
        %970 = vmatpush.bf16.msra.mxu0 0
        %971 = vmatpush.bf16.msra.mxu0 0
        %972 = vmatpush.bf16.msra.mxu0 %v880
        %973 = vmatpush.bf16.msra.mxu0 %v870
        %974 = vmatmul.bf16.gmra.mxu0 %v908
        %v975 = vpop.f32.mrf.mxu0
        %v976 = vadd.f32 %v785, %v975
        %v977 = vpop.f32.mrf.mxu0
        %v978 = vadd.f32 %v785, %v977
        %979 = vdwg.mxu0
        %980 = vmatpush.bf16.msra.mxu0 0
        %981 = vmatpush.bf16.msra.mxu0 0
        %982 = vmatpush.bf16.msra.mxu0 0
        %983 = vmatpush.bf16.msra.mxu0 0
        %984 = vmatpush.bf16.msra.mxu0 0
        %985 = vmatpush.bf16.msra.mxu0 0
        %986 = vmatpush.bf16.msra.mxu0 %v881
        %987 = vmatpush.bf16.msra.mxu0 %v871
        %988 = vmatmul.bf16.gmra.mxu0 %v908
        %v989 = vpop.f32.mrf.mxu0
        %v990 = vadd.f32 %v786, %v989
        %v991 = vpop.f32.mrf.mxu0
        %v992 = vadd.f32 %v786, %v991
        %993 = vdwg.mxu0
        %994 = vmatpush.bf16.msra.mxu0 0
        %995 = vmatpush.bf16.msra.mxu0 0
        %996 = vmatpush.bf16.msra.mxu0 0
        %997 = vmatpush.bf16.msra.mxu0 0
        %998 = vmatpush.bf16.msra.mxu0 0
        %999 = vmatpush.bf16.msra.mxu0 0
        %1000 = vmatpush.bf16.msra.mxu0 %v882
        %1001 = vmatpush.bf16.msra.mxu0 %v872
        %1002 = vmatmul.bf16.gmra.mxu0 %v908
        %v1003 = vpop.f32.mrf.mxu0
        %v1004 = vadd.f32 %v787, %v1003
        %v1005 = vpop.f32.mrf.mxu0
        %v1006 = vadd.f32 %v787, %v1005
        %1007 = vdwg.mxu0
        %1008 = vmatpush.bf16.msra.mxu0 0
        %1009 = vmatpush.bf16.msra.mxu0 0
        %1010 = vmatpush.bf16.msra.mxu0 0
        %1011 = vmatpush.bf16.msra.mxu0 0
        %1012 = vmatpush.bf16.msra.mxu0 0
        %1013 = vmatpush.bf16.msra.mxu0 0
        %1014 = vmatpush.bf16.msra.mxu0 %v883
        %1015 = vmatpush.bf16.msra.mxu0 %v873
        %1016 = vmatmul.bf16.gmra.mxu0 %v908
        %v1017 = vpop.f32.mrf.mxu0
        %v1018 = vadd.f32 %v788, %v1017
        %v1019 = vpop.f32.mrf.mxu0
        %v1020 = vadd.f32 %v788, %v1019
        %1021 = vdwg.mxu0
        %1022 = vmatpush.bf16.msra.mxu0 0
        %1023 = vmatpush.bf16.msra.mxu0 0
        %1024 = vmatpush.bf16.msra.mxu0 0
        %1025 = vmatpush.bf16.msra.mxu0 0
        %1026 = vmatpush.bf16.msra.mxu0 0
        %1027 = vmatpush.bf16.msra.mxu0 0
        %1028 = vmatpush.bf16.msra.mxu0 %v884
        %1029 = vmatpush.bf16.msra.mxu0 %v874
        %1030 = vmatmul.bf16.gmra.mxu0 %v908
        %v1031 = vpop.f32.mrf.mxu0
        %v1032 = vadd.f32 %v789, %v1031
        %v1033 = vpop.f32.mrf.mxu0
        %v1034 = vadd.f32 %v789, %v1033
        %1035 = vdwg.mxu0
        %1036 = vmatpush.bf16.msra.mxu0 0
        %1037 = vmatpush.bf16.msra.mxu0 0
        %1038 = vmatpush.bf16.msra.mxu0 0
        %1039 = vmatpush.bf16.msra.mxu0 0
        %1040 = vmatpush.bf16.msra.mxu0 0
        %1041 = vmatpush.bf16.msra.mxu0 0
        %1042 = vmatpush.bf16.msra.mxu0 %v885
        %1043 = vmatpush.bf16.msra.mxu0 %v875
        %1044 = vmatmul.bf16.gmra.mxu0 %v908
        %v1045 = vpop.f32.mrf.mxu0
        %v1046 = vadd.f32 %v790, %v1045
        %v1047 = vpop.f32.mrf.mxu0
        %v1048 = vadd.f32 %v790, %v1047
        %1049 = vdwg.mxu0
        %s1050 = smul.u32 %s40, 1280
        %s1051 = sshra.s32 %s1050, 7
        %s1052 = sand.u32 %s1050, 127
        %s1053 = smul.addr %s1051, 4
        %s1054 = scalar_lea.vmem [#allocation16], %s1053
        %v1055 = vld [vmem:[%s1054] sm:$0xff]
        %v1056 = vld [vmem:[%s1054 + $0x8] sm:$0xff]
        %v1057 = vld [vmem:[%s1054 + $0x10] sm:$0xff]
        %v1058 = vld [vmem:[%s1054 + $0x18] sm:$0xff]
        %v1059 = vld [vmem:[%s1054 + $0x20] sm:$0xff]
        %v1060 = vld [vmem:[%s1054 + $0xa0] sm:$0xff]
        %v1061 = vld [vmem:[%s1054 + $0xa8] sm:$0xff]
        %v1062 = vld [vmem:[%s1054 + $0xb0] sm:$0xff]
        %v1063 = vld [vmem:[%s1054 + $0xb8] sm:$0xff]
        %v1064 = vld [vmem:[%s1054 + $0xc0] sm:$0xff]
        %v1065 = vld [vmem:[#allocation3] sm:$0xf]
        %v1066 = vld [vmem:[#allocation3 + $0x4] sm:$0xf]
        %v1069 = vunpack.c.l.b16 %v1065
        %v1070 = vunpack.c.l.b16 %v1066
        %v1071 = vpack.c.b16 %v1070, %v1069
        %v1082 = vunpack.c.l.b16 %v1055
        %v1083 = vunpack.c.h.b16 %v1055
        %v1084 = vunpack.c.l.b16 %v1056
        %v1085 = vunpack.c.h.b16 %v1056
        %v1086 = vunpack.c.l.b16 %v1057
        %v1087 = vunpack.c.h.b16 %v1057
        %v1088 = vunpack.c.l.b16 %v1058
        %v1089 = vunpack.c.h.b16 %v1058
        %v1090 = vunpack.c.l.b16 %v1059
        %v1091 = vunpack.c.h.b16 %v1059
        %v1092 = vunpack.c.l.b16 %v1060
        %v1093 = vunpack.c.h.b16 %v1060
        %v1094 = vunpack.c.l.b16 %v1061
        %v1095 = vunpack.c.h.b16 %v1061
        %v1096 = vunpack.c.l.b16 %v1062
        %v1097 = vunpack.c.h.b16 %v1062
        %v1098 = vunpack.c.l.b16 %v1063
        %v1099 = vunpack.c.h.b16 %v1063
        %v1100 = vunpack.c.l.b16 %v1064
        %v1101 = vunpack.c.h.b16 %v1064
        %v1102 = vpack.c.b16 %v1092, %v1082
        %v1103 = vpack.c.b16 %v1093, %v1083
        %v1104 = vpack.c.b16 %v1094, %v1084
        %v1105 = vpack.c.b16 %v1095, %v1085
        %v1106 = vpack.c.b16 %v1096, %v1086
        %v1107 = vpack.c.b16 %v1097, %v1087
        %v1108 = vpack.c.b16 %v1098, %v1088
        %v1109 = vpack.c.b16 %v1099, %v1089
        %v1110 = vpack.c.b16 %v1100, %v1090
        %v1111 = vpack.c.b16 %v1101, %v1091
        %vm1122 = vcmask 130048
        %v1124 = vsel %vm1122, %v1071, 0
        %1126 = vmatpush.bf16.msra.mxu0 0
        %1127 = vmatpush.bf16.msra.mxu0 0
        %1128 = vmatpush.bf16.msra.mxu0 0
        %1129 = vmatpush.bf16.msra.mxu0 0
        %1130 = vmatpush.bf16.msra.mxu0 0
        %1131 = vmatpush.bf16.msra.mxu0 0
        %1132 = vmatpush.bf16.msra.mxu0 0
        %1133 = vmatpush.bf16.msra.mxu0 %v1102
        %1134 = vmatmul.bf16.gmra.mxu0 %v1124
        %v1135 = vpop.f32.mrf.mxu0
        %v1136 = vadd.f32 0.0, %v1135
        %v1137 = vpop.f32.mrf.mxu0
        %v1138 = vadd.f32 0.0, %v1137
        %1139 = vdwg.mxu0
        %1140 = vmatpush.bf16.msra.mxu0 0
        %1141 = vmatpush.bf16.msra.mxu0 0
        %1142 = vmatpush.bf16.msra.mxu0 0
        %1143 = vmatpush.bf16.msra.mxu0 0
        %1144 = vmatpush.bf16.msra.mxu0 0
        %1145 = vmatpush.bf16.msra.mxu0 0
        %1146 = vmatpush.bf16.msra.mxu0 0
        %1147 = vmatpush.bf16.msra.mxu0 %v1103
        %1148 = vmatmul.bf16.gmra.mxu0 %v1124
        %v1149 = vpop.f32.mrf.mxu0
        %v1150 = vadd.f32 0.0, %v1149
        %v1151 = vpop.f32.mrf.mxu0
        %v1152 = vadd.f32 0.0, %v1151
        %1153 = vdwg.mxu0
        %1154 = vmatpush.bf16.msra.mxu0 0
        %1155 = vmatpush.bf16.msra.mxu0 0
        %1156 = vmatpush.bf16.msra.mxu0 0
        %1157 = vmatpush.bf16.msra.mxu0 0
        %1158 = vmatpush.bf16.msra.mxu0 0
        %1159 = vmatpush.bf16.msra.mxu0 0
        %1160 = vmatpush.bf16.msra.mxu0 0
        %1161 = vmatpush.bf16.msra.mxu0 %v1104
        %1162 = vmatmul.bf16.gmra.mxu0 %v1124
        %v1163 = vpop.f32.mrf.mxu0
        %v1164 = vadd.f32 0.0, %v1163
        %v1165 = vpop.f32.mrf.mxu0
        %v1166 = vadd.f32 0.0, %v1165
        %1167 = vdwg.mxu0
        %1168 = vmatpush.bf16.msra.mxu0 0
        %1169 = vmatpush.bf16.msra.mxu0 0
        %1170 = vmatpush.bf16.msra.mxu0 0
        %1171 = vmatpush.bf16.msra.mxu0 0
        %1172 = vmatpush.bf16.msra.mxu0 0
        %1173 = vmatpush.bf16.msra.mxu0 0
        %1174 = vmatpush.bf16.msra.mxu0 0
        %1175 = vmatpush.bf16.msra.mxu0 %v1105
        %1176 = vmatmul.bf16.gmra.mxu0 %v1124
        %v1177 = vpop.f32.mrf.mxu0
        %v1178 = vadd.f32 0.0, %v1177
        %v1179 = vpop.f32.mrf.mxu0
        %v1180 = vadd.f32 0.0, %v1179
        %1181 = vdwg.mxu0
        %1182 = vmatpush.bf16.msra.mxu0 0
        %1183 = vmatpush.bf16.msra.mxu0 0
        %1184 = vmatpush.bf16.msra.mxu0 0
        %1185 = vmatpush.bf16.msra.mxu0 0
        %1186 = vmatpush.bf16.msra.mxu0 0
        %1187 = vmatpush.bf16.msra.mxu0 0
        %1188 = vmatpush.bf16.msra.mxu0 0
        %1189 = vmatpush.bf16.msra.mxu0 %v1106
        %1190 = vmatmul.bf16.gmra.mxu0 %v1124
        %v1191 = vpop.f32.mrf.mxu0
        %v1192 = vadd.f32 0.0, %v1191
        %v1193 = vpop.f32.mrf.mxu0
        %v1194 = vadd.f32 0.0, %v1193
        %1195 = vdwg.mxu0
        %1196 = vmatpush.bf16.msra.mxu0 0
        %1197 = vmatpush.bf16.msra.mxu0 0
        %1198 = vmatpush.bf16.msra.mxu0 0
        %1199 = vmatpush.bf16.msra.mxu0 0
        %1200 = vmatpush.bf16.msra.mxu0 0
        %1201 = vmatpush.bf16.msra.mxu0 0
        %1202 = vmatpush.bf16.msra.mxu0 0
        %1203 = vmatpush.bf16.msra.mxu0 %v1107
        %1204 = vmatmul.bf16.gmra.mxu0 %v1124
        %v1205 = vpop.f32.mrf.mxu0
        %v1206 = vadd.f32 0.0, %v1205
        %v1207 = vpop.f32.mrf.mxu0
        %v1208 = vadd.f32 0.0, %v1207
        %1209 = vdwg.mxu0
        %1210 = vmatpush.bf16.msra.mxu0 0
        %1211 = vmatpush.bf16.msra.mxu0 0
        %1212 = vmatpush.bf16.msra.mxu0 0
        %1213 = vmatpush.bf16.msra.mxu0 0
        %1214 = vmatpush.bf16.msra.mxu0 0
        %1215 = vmatpush.bf16.msra.mxu0 0
        %1216 = vmatpush.bf16.msra.mxu0 0
        %1217 = vmatpush.bf16.msra.mxu0 %v1108
        %1218 = vmatmul.bf16.gmra.mxu0 %v1124
        %v1219 = vpop.f32.mrf.mxu0
        %v1220 = vadd.f32 0.0, %v1219
        %v1221 = vpop.f32.mrf.mxu0
        %v1222 = vadd.f32 0.0, %v1221
        %1223 = vdwg.mxu0
        %1224 = vmatpush.bf16.msra.mxu0 0
        %1225 = vmatpush.bf16.msra.mxu0 0
        %1226 = vmatpush.bf16.msra.mxu0 0
        %1227 = vmatpush.bf16.msra.mxu0 0
        %1228 = vmatpush.bf16.msra.mxu0 0
        %1229 = vmatpush.bf16.msra.mxu0 0
        %1230 = vmatpush.bf16.msra.mxu0 0
        %1231 = vmatpush.bf16.msra.mxu0 %v1109
        %1232 = vmatmul.bf16.gmra.mxu0 %v1124
        %v1233 = vpop.f32.mrf.mxu0
        %v1234 = vadd.f32 0.0, %v1233
        %v1235 = vpop.f32.mrf.mxu0
        %v1236 = vadd.f32 0.0, %v1235
        %1237 = vdwg.mxu0
        %1238 = vmatpush.bf16.msra.mxu0 0
        %1239 = vmatpush.bf16.msra.mxu0 0
        %1240 = vmatpush.bf16.msra.mxu0 0
        %1241 = vmatpush.bf16.msra.mxu0 0
        %1242 = vmatpush.bf16.msra.mxu0 0
        %1243 = vmatpush.bf16.msra.mxu0 0
        %1244 = vmatpush.bf16.msra.mxu0 0
        %1245 = vmatpush.bf16.msra.mxu0 %v1110
        %1246 = vmatmul.bf16.gmra.mxu0 %v1124
        %v1247 = vpop.f32.mrf.mxu0
        %v1248 = vadd.f32 0.0, %v1247
        %v1249 = vpop.f32.mrf.mxu0
        %v1250 = vadd.f32 0.0, %v1249
        %1251 = vdwg.mxu0
        %1252 = vmatpush.bf16.msra.mxu0 0
        %1253 = vmatpush.bf16.msra.mxu0 0
        %1254 = vmatpush.bf16.msra.mxu0 0
        %1255 = vmatpush.bf16.msra.mxu0 0
        %1256 = vmatpush.bf16.msra.mxu0 0
        %1257 = vmatpush.bf16.msra.mxu0 0
        %1258 = vmatpush.bf16.msra.mxu0 0
        %1259 = vmatpush.bf16.msra.mxu0 %v1111
        %1260 = vmatmul.bf16.gmra.mxu0 %v1124
        %v1261 = vpop.f32.mrf.mxu0
        %v1262 = vadd.f32 0.0, %v1261
        %v1263 = vpop.f32.mrf.mxu0
        %v1264 = vadd.f32 0.0, %v1263
        %1265 = vdwg.mxu0
        %v1266 = vadd.f32 %v920, %v1136
        %v1267 = vadd.f32 %v934, %v1150
        %v1268 = vadd.f32 %v948, %v1164
        %v1269 = vadd.f32 %v962, %v1178
        %v1270 = vadd.f32 %v976, %v1192
        %v1271 = vadd.f32 %v990, %v1206
        %v1272 = vadd.f32 %v1004, %v1220
        %v1273 = vadd.f32 %v1018, %v1234
        %v1274 = vadd.f32 %v1032, %v1248
        %v1275 = vadd.f32 %v1046, %v1262
        %v1276 = vadd.f32 %v922, %v1138
        %v1277 = vadd.f32 %v936, %v1152
        %v1278 = vadd.f32 %v950, %v1166
        %v1279 = vadd.f32 %v964, %v1180
        %v1280 = vadd.f32 %v978, %v1194
        %v1281 = vadd.f32 %v992, %v1208
        %v1282 = vadd.f32 %v1006, %v1222
        %v1283 = vadd.f32 %v1020, %v1236
        %v1284 = vadd.f32 %v1034, %v1250
        %v1285 = vadd.f32 %v1048, %v1264
        %1286 = vst [vmem:[%s601] sm:$0xff] %v1266
        %1287 = vst [vmem:[%s601 + $0x8] sm:$0xff] %v1267
        %1288 = vst [vmem:[%s601 + $0x10] sm:$0xff] %v1268
        %1289 = vst [vmem:[%s601 + $0x18] sm:$0xff] %v1269
        %1290 = vst [vmem:[%s601 + $0x20] sm:$0xff] %v1270
        %1291 = vst [vmem:[%s601 + $0x28] sm:$0xff] %v1271
        %1292 = vst [vmem:[%s601 + $0x30] sm:$0xff] %v1272
        %1293 = vst [vmem:[%s601 + $0x38] sm:$0xff] %v1273
        %1294 = vst [vmem:[%s601 + $0x40] sm:$0xff] %v1274
        %1295 = vst [vmem:[%s601 + $0x48] sm:$0xff] %v1275
        %1296 = vst [vmem:[%s601 + $0x50] sm:$0xff] %v1276
        %1297 = vst [vmem:[%s601 + $0x58] sm:$0xff] %v1277
        %1298 = vst [vmem:[%s601 + $0x60] sm:$0xff] %v1278
        %1299 = vst [vmem:[%s601 + $0x68] sm:$0xff] %v1279
        %1300 = vst [vmem:[%s601 + $0x70] sm:$0xff] %v1280
        %1301 = vst [vmem:[%s601 + $0x78] sm:$0xff] %v1281
        %1302 = vst [vmem:[%s601 + $0x80] sm:$0xff] %v1282
        %1303 = vst [vmem:[%s601 + $0x88] sm:$0xff] %v1283
        %1304 = vst [vmem:[%s601 + $0x90] sm:$0xff] %v1284
        %1305 = vst [vmem:[%s601 + $0x98] sm:$0xff] %v1285
        %s1306 = sand.u32 %s308, 1
        %s1307 = scalar_lea.sflag [#allocation6], %s1306
        %s1308 = sand.u32 %s308, 1
        %s1309 = smul.addr %s1308, 160
        %s1310 = scalar_lea.vmem [#allocation18], %s1309
        // Predicated region
        $region101: #{tpu_custom_call.1} parent=63 // pred_check
          %p1311 = pneg %p318
        $region102: #{tpu_custom_call.1} parent=63 // pred_check_branch
          %1313 = sbr.rel (%p1311) target = $region104
        $region103: #{tpu_custom_call.1} parent=63 // pred_region
          %s1314 = smul.u32 2, %s39
          %s1315 = smul.u32 10, %s40
          %1317 = vsyncadd %s1307, 0
          %s1318 = smul.addr %s1314, 40
          %s1319 = sadd.s32 %s1315, %s1318
          %s1320 = smul.addr %s1319, 8
          %s1321 = scalar_lea.hbm %s11, %s1320
          %s1322 = sshll.u32 %s1310, 4
          %s1323 = int_to_ptr.vmem [resolvable:$true] %s1322
          %s1324 = sshll.u32 %s1321, 4
          %s1325 = int_to_ptr.hbm [resolvable:$true] %s1324
          %1330 = dma.vmem_to_hbm [thread:$0]  %s1323, 2560, %s1325, %s1307, 1280, 5120, 80
        $region104: #{tpu_custom_call.1} parent=63 // pred_fallthru
          _
        // Predicated region
        $region105: #{tpu_custom_call.1} parent=63 // pred_check
          %p1331 = pneg %p344
        $region106: #{tpu_custom_call.1} parent=63 // pred_check_branch
          %1333 = sbr.rel (%p1331) target = $region108
        $region107: #{tpu_custom_call.1} parent=63 // pred_region
          %s1334 = smul.u32 2, %s39
          %1336 = vsyncadd [#allocation20], 0
          %s1337 = smul.addr %s1334, 8
          %s1338 = scalar_lea.hbm %s12, %s1337
          %s1339 = sshll.u32 [#allocation19], 4
          %s1340 = int_to_ptr.vmem [resolvable:$true] %s1339
          %s1341 = sshll.u32 %s1338, 4
          %s1342 = int_to_ptr.hbm [resolvable:$true] %s1341
          %1347 = dma.vmem_to_hbm [thread:$0]  %s1340, 256, %s1342, [#allocation20], 128, 128, 8
        $region108: #{tpu_custom_call.1} parent=63 // pred_fallthru
          _
        // Predicated region
        $region109: #{tpu_custom_call.1} parent=63 // pred_check
          %p1348 = pneg %p344
        $region110: #{tpu_custom_call.1} parent=63 // pred_check_branch
          %1350 = sbr.rel (%p1348) target = $region112
        $region111: #{tpu_custom_call.1} parent=63 // pred_region
          %1352 = dma.done [#allocation20], 256
        $region112: #{tpu_custom_call.1} parent=63 // pred_fallthru
          _
      $region64: #{tpu_custom_call.1} parent=5 // pred_fallthru
        _
      %p1353 = scmp.le.s32.totalorder 2, %s30
      // Predicated region
      $region113: #{tpu_custom_call.1} parent=5 // pred_check
        %p1354 = pneg %p1353
      $region114: #{tpu_custom_call.1} parent=5 // pred_check_branch
        %1356 = sbr.rel (%p1354) target = $region116
      $region115: #{tpu_custom_call.1} parent=5 // pred_region
        %s1357 = ssub.s32 %s30, 2
        // Predicated region
        $region117: #{tpu_custom_call.1} parent=115 // pred_check
          %p1358 = pneg %p324
        $region118: #{tpu_custom_call.1} parent=115 // pred_check_branch
          %1360 = sbr.rel (%p1358) target = $region120
        $region119: #{tpu_custom_call.1} parent=115 // pred_region
          %s1361 = sand.u32 %s309, 1
          %s1362 = scalar_lea.sflag [#allocation6], %s1361
          %s1363 = sand.u32 %s309, 1
          %s1364 = smul.addr %s1363, 160
          %s1365 = scalar_lea.vmem [#allocation18], %s1364
          %1367 = dma.done %s1362, 2560
        $region120: #{tpu_custom_call.1} parent=115 // pred_fallthru
          _
      $region116: #{tpu_custom_call.1} parent=5 // pred_fallthru
        _
    $region6: #{tpu_custom_call.1} parent=1 // loop_footer
      %s34 = sadd.s32 1, %s30
    $region7: #{tpu_custom_call.1} parent=1 // loop_footer_branch
      %29 = sbr.rel target = $region3
    $region8: #{tpu_custom_call.1} parent=1 // loop_exit
      _
    %1368 = vsyncpa [#allocation5], 1
    %s1369 = scalar_lea.sflag [#allocation5], 1
    %1370 = vsyncpa %s1369, 1
    %1371 = vsyncpa [#allocation8], 1
    %1372 = vsyncpa [#allocation11], 1
    %1373 = vsyncpa [#allocation14], 1
    %s1374 = scalar_lea.sflag [#allocation14], 1
    %1375 = vsyncpa %s1374, 1
    %1376 = vsyncpa [#allocation17], 1
    %1377 = vsyncpa [#allocation6], 1
    %s1378 = scalar_lea.sflag [#allocation6], 1
    %1379 = vsyncpa %s1378, 1
    %1380 = vsyncpa [#allocation20], 1

</llo_original>
